<compile_context>
chip_gen: v5e
topology: v5e:2x2
jax: 0.10.0
libtpu: 0.0.40
codegen_flags: <defaults>
</compile_context>

<pallas_src>
import math
import functools

import jax
import jax.numpy as jnp
from jax.experimental import pallas as pl
from jax.experimental.pallas import tpu as pltpu


# ----------------------------- small helpers --------------------------------

def _round_up(x, m):
    return ((x + m - 1) // m) * m


def _device_kind():
    try:
        return jax.devices()[0].device_kind.lower()
    except Exception:
        return ""


def _pick_num_batch_tiles(batch, seq):
    # Only split the batch across grid tiles on 2-TensorCore chips (v7x) AND
    # when each tile still has enough rows to fill the MXU; on 1-TC chips a
    # split is just a serial loop that halves M and re-streams every layer's
    # weights twice from HBM.
    if "v7" in _device_kind() and batch % 2 == 0 and (batch * seq) // 2 >= 256:
        return 2
    return 1


def _vmem_limit_bytes(needed):
    # Generation-aware cap: leave headroom for Mosaic internal scratch on
    # v7x's 64 MiB physical VMEM; v5e/v6e have 128 MiB physical.
    cap = (50 if "v7" in _device_kind() else 96) * 1024 * 1024
    return int(min(cap, max(32 * 1024 * 1024, 2 * needed)))


def _layer_norm(x, w, b, eps=1e-5):
    # PyTorch nn.LayerNorm semantics: biased variance, eps inside rsqrt (fp32).
    mu = jnp.mean(x, axis=-1, keepdims=True)
    var = jnp.mean(jnp.square(x - mu), axis=-1, keepdims=True)
    return (x - mu) * jax.lax.rsqrt(var + eps) * w + b


def _gelu_tanh(x):
    # TODO(synk): PyTorch F.gelu defaults to exact erf; tanh approximation
    # differs by <~1e-3 absolute but uses a single EUP transcendental.
    c = math.sqrt(2.0 / math.pi)
    return 0.5 * x * (1.0 + jnp.tanh(c * (x + 0.044715 * x * x * x)))


# ----------------------------- patch embedding kernel -----------------------

def _patch_embed_kernel(p_ref, w_ref, b_ref, o_ref):
    o_ref[...] = (
        jnp.dot(p_ref[...], w_ref[...], preferred_element_type=jnp.float32)
        + b_ref[...]
    ).astype(o_ref.dtype)


def patch_embed(patches_bf16, w_bf16, b, tm=512):
    # PatchembedSuper: Conv2d(k=ps, stride=ps) == matmul over flattened patches.
    M, K = patches_bf16.shape
    D = w_bf16.shape[1]
    tm = min(tm, M)
    return pl.pallas_call(
        _patch_embed_kernel,
        out_shape=jax.ShapeDtypeStruct((M, D), jnp.float32),
        grid=(pl.cdiv(M, tm),),
        in_specs=[
            pl.BlockSpec((tm, K), lambda i: (i, 0)),
            pl.BlockSpec((K, D), lambda i: (0, 0)),
            pl.BlockSpec((1, D), lambda i: (0, 0)),
        ],
        out_specs=pl.BlockSpec((tm, D), lambda i: (i, 0)),
        compiler_params=pltpu.CompilerParams(dimension_semantics=("parallel",)),
    )(patches_bf16, w_bf16, b)


# ----------------------------- fused encoder stack + head kernel ------------

def _encoder_stack_kernel(x_ref,
                          ln1w_ref, ln1b_ref, qkvw_ref, projw_ref, projb_ref,
                          ln2w_ref, ln2b_ref, fc1w_ref, fc1b_ref, fc2w_ref, fc2b_ref,
                          normw_ref, normb_ref, headw_ref, headb_ref,
                          o_ref,
                          tok_ref, qkv_ref, attn_ref,
                          *, num_heads, head_group, b_tile, seq, seq_valid):
    d = pl.program_id(1)
    rows, D = tok_ref.shape
    hd = D // num_heads
    g = head_group                       # heads per lane-dense store group
    ngroups = num_heads // g
    gw = g * hd
    bf16 = jnp.bfloat16

    # layer 0: one aligned copy of this batch tile's tokens into the resident scratch.
    @pl.when(d == 0)
    def _():
        tok_ref[...] = x_ref[...]

    x = tok_ref[...]                                        # (rows, D) fp32

    # ---- multi-head self-attention (pre-norm); softmax scale folded into Q weights ----
    h = _layer_norm(x, ln1w_ref[0], ln1b_ref[0])
    qkv_ref[...] = jnp.dot(h.astype(bf16), qkvw_ref[0],
                           preferred_element_type=jnp.float32).astype(bf16)
    # TODO(synk): qkv_bias=False and relative_position=False (module defaults).

    if seq_valid < seq:
        key_ids = jax.lax.broadcasted_iota(jnp.int32, (1, seq), 1)
        neg_mask = jnp.where(key_ids < seq_valid, 0.0, -1e30).astype(jnp.float32)
    else:
        neg_mask = None

    def attn_batch(b, carry):
        # dynamic, tile-aligned row offset (seq is padded to a multiple of 16);
        # all lane (column) offsets below are static Python ints.
        r0 = pl.multiple_of(b * seq, 16)
        for grp in range(ngroups):
            outs = []
            for hh in range(grp * g, (grp + 1) * g):
                c = hh * hd
                q = qkv_ref[pl.ds(r0, seq), c:c + hd]
                k = qkv_ref[pl.ds(r0, seq), D + c:D + c + hd]
                v = qkv_ref[pl.ds(r0, seq), 2 * D + c:2 * D + c + hd]
                s = jax.lax.dot_general(q, k, (((1,), (1,)), ((), ())),
                                        preferred_element_type=jnp.float32)
                if neg_mask is not None:
                    s = s + neg_mask            # mask padded key positions
                s = s - jnp.max(s, axis=-1, keepdims=True)
                p = jnp.exp(s)
                p = p * pl.reciprocal(jnp.sum(p, axis=-1, keepdims=True), approx=True)
                outs.append(jnp.dot(p.astype(bf16), v,
                                    preferred_element_type=jnp.float32))
            slab = outs[0] if g == 1 else jnp.concatenate(outs, axis=-1)
            # lane-dense (seq, g*hd) store of the whole head group
            attn_ref[pl.ds(r0, seq), grp * gw:(grp + 1) * gw] = slab.astype(bf16)
        return carry

    jax.lax.fori_loop(0, b_tile, attn_batch, 0)

    # single K=D projection over the concatenated heads of all rows.
    attn = jnp.dot(attn_ref[...], projw_ref[0],
                   preferred_element_type=jnp.float32) + projb_ref[0]
    x = x + attn
    # TODO(synk): attn-dropout / dropout / DropPath are identity at inference.

    # ---- feed-forward network (pre-norm) ----
    h = _layer_norm(x, ln2w_ref[0], ln2b_ref[0])
    h = jnp.dot(h.astype(bf16), fc1w_ref[0],
                preferred_element_type=jnp.float32) + fc1b_ref[0]
    h = _gelu_tanh(h)
    h = jnp.dot(h.astype(bf16), fc2w_ref[0],
                preferred_element_type=jnp.float32) + fc2b_ref[0]
    x = x + h

    tok_ref[...] = x                                        # carry to next layer

    # last layer: fused final LayerNorm + classifier head on the cls tokens.
    @pl.when(d == pl.num_programs(1) - 1)
    def _():
        if b_tile == 1:
            cls = x[0:1, :]
        else:
            cls = jnp.concatenate([x[b * seq:b * seq + 1, :] for b in range(b_tile)],
                                  axis=0)                   # (b_tile, D)
        hc = _layer_norm(cls, normw_ref[...], normb_ref[...])
        logits = jnp.dot(hc.astype(bf16), headw_ref[...],
                         preferred_element_type=jnp.float32) + headb_ref[...]
        o_ref[0] = logits.astype(o_ref.dtype)


def encoder_stack(tokens_flat, params, *, num_heads, seq, seq_valid, batch):
    rows_total, D = tokens_flat.shape
    depth = params['qkv_w'].shape[0]
    F_ = params['fc1_w'].shape[2]
    c_pad = params['head_w'].shape[1]
    hd = D // num_heads

    nbt = _pick_num_batch_tiles(batch, seq)
    b_tile = batch // nbt
    rows = b_tile * seq

    # heads per group so that each attention-output store is >=128 lanes wide
    # (or all heads if D itself is narrower than 128).
    g = max(1, min(num_heads, 128 // max(hd, 1)))
    while num_heads % g:
        g -= 1

    kernel = functools.partial(_encoder_stack_kernel, num_heads=num_heads,
                               head_group=g, b_tile=b_tile, seq=seq,
                               seq_valid=seq_valid)

    def dstack(*shape):          # per-layer weight, indexed by the depth axis
        zeros = (0,) * len(shape)
        return pl.BlockSpec((1,) + tuple(shape), lambda bi, d: (d,) + zeros)

    def const(*shape):           # layer-independent param, resident
        zeros = (0,) * len(shape)
        return pl.BlockSpec(tuple(shape), lambda bi, d: zeros)

    # VMEM byte budget: double-buffered per-layer weight set + resident scratches
    # + (double-buffered) token block + constants, with slack.
    layer_w_bytes = (3 * D * D + D * D + 2 * D * F_) * 2 + (4 * D + F_ + 2 * D) * 4
    scratch_bytes = rows * D * 4 + rows * 3 * D * 2 + rows * D * 2
    const_bytes = (2 * D + c_pad) * 4 + D * c_pad * 2
    need = 2 * layer_w_bytes + scratch_bytes + 2 * rows * D * 4 + const_bytes + (1 << 20)

    # advisory cost estimate so XLA schedules surrounding ops sensibly.
    flops = 2 * batch * seq * depth * (4 * D * D + 2 * D * F_ + 2 * seq * D)
    transc = batch * seq * depth * (F_ + num_heads * seq)
    bytes_acc = nbt * depth * layer_w_bytes + 2 * rows_total * D * 4 + const_bytes

    out = pl.pallas_call(
        kernel,
        out_shape=jax.ShapeDtypeStruct((nbt, b_tile, c_pad), jnp.float32),
        grid=(nbt, depth),
        in_specs=[
            pl.BlockSpec((rows, D), lambda bi, d: (bi, 0)),           # tokens (flat)
            dstack(1, D), dstack(1, D),                               # attn LN
            dstack(D, 3 * D),                                         # qkv (no bias)
            dstack(D, D), dstack(1, D),                               # attn proj
            dstack(1, D), dstack(1, D),                               # ffn LN
            dstack(D, F_), dstack(1, F_),                             # fc1
            dstack(F_, D), dstack(1, D),                              # fc2
            const(1, D), const(1, D),                                 # final LN
            const(D, c_pad), const(1, c_pad),                         # head
        ],
        out_specs=pl.BlockSpec((1, b_tile, c_pad), lambda bi, d: (bi, 0, 0)),
        scratch_shapes=[
            pltpu.VMEM((rows, D), jnp.float32),      # resident tokens (fp32)
            pltpu.VMEM((rows, 3 * D), jnp.bfloat16), # qkv activations (bf16)
            pltpu.VMEM((rows, D), jnp.bfloat16),     # concatenated head outs (bf16)
        ],
        compiler_params=pltpu.CompilerParams(
            dimension_semantics=("parallel", "arbitrary"),
            vmem_limit_bytes=_vmem_limit_bytes(need)),
        cost_estimate=pl.CostEstimate(flops=flops, transcendentals=transc,
                                      bytes_accessed=bytes_acc),
    )(tokens_flat,
      params['ln1_w'], params['ln1_b'], params['qkv_w'],
      params['proj_w'], params['proj_b'],
      params['ln2_w'], params['ln2_b'],
      params['fc1_w'], params['fc1_b'], params['fc2_w'], params['fc2_b'],
      params['norm_w'], params['norm_b'], params['head_w'], params['head_b'])

    return out.reshape(batch, c_pad)


# ----------------------------- parameters & forward --------------------------

def init_params(key, *, in_chans, patch_size, embed_dim, depth, mlp_ratio,
                num_classes, num_patches, num_heads):
    D = embed_dim
    ffn = int(mlp_ratio * embed_dim)
    c_pad = _round_up(num_classes, 128)                    # lane-dense logits
    scale = float((D // num_heads) ** -0.5)

    def tn(k, shape):  # trunc_normal_(std=0.02) stand-in (synthetic weights)
        return (0.02 * jax.random.normal(k, shape)).astype(jnp.float32)

    keys = jax.random.split(key, 4)
    head_w = jnp.zeros((D, c_pad), jnp.float32).at[:, :num_classes].set(
        tn(keys[3], (D, num_classes)))
    blk_keys = [jax.random.split(jax.random.fold_in(key, 100 + i), 4)
                for i in range(depth)]

    def qkv_with_scale(k):
        w = tn(k, (D, 3 * D))
        return w.at[:, :D].multiply(scale)   # fold softmax scale into Q columns

    params = {
        # patch embedding — weight stored bf16 (MXU operand, half the DMA)
        'patch_w': tn(keys[0], (in_chans * patch_size * patch_size, D)).astype(jnp.bfloat16),
        'patch_b': jnp.zeros((1, D), jnp.float32),
        'cls_token': tn(keys[1], (1, 1, D)),
        'pos_embed': tn(keys[2], (1, num_patches + 1, D)),
        # final LayerNorm + lane-padded classifier head
        'norm_w': jnp.ones((1, D), jnp.float32),
        'norm_b': jnp.zeros((1, D), jnp.float32),
        'head_w': head_w.astype(jnp.bfloat16),
        'head_b': jnp.zeros((1, c_pad), jnp.float32),
        # depth-stacked encoder-block parameters (leading `depth` axis)
        'ln1_w': jnp.ones((depth, 1, D), jnp.float32),
        'ln1_b': jnp.zeros((depth, 1, D), jnp.float32),
        'qkv_w': jnp.stack([qkv_with_scale(blk_keys[i][0]) for i in range(depth)]).astype(jnp.bfloat16),
        'proj_w': jnp.stack([tn(blk_keys[i][1], (D, D)) for i in range(depth)]).astype(jnp.bfloat16),
        'proj_b': jnp.zeros((depth, 1, D), jnp.float32),
        'ln2_w': jnp.ones((depth, 1, D), jnp.float32),
        'ln2_b': jnp.zeros((depth, 1, D), jnp.float32),
        'fc1_w': jnp.stack([tn(blk_keys[i][2], (D, ffn)) for i in range(depth)]).astype(jnp.bfloat16),
        'fc1_b': jnp.zeros((depth, 1, ffn), jnp.float32),
        'fc2_w': jnp.stack([tn(blk_keys[i][3], (ffn, D)) for i in range(depth)]).astype(jnp.bfloat16),
        'fc2_b': jnp.zeros((depth, 1, D), jnp.float32),
    }
    return params


def vit_super_forward(x, params, *, patch_size, num_heads, num_classes):
    B, C, H, W = x.shape
    ps = patch_size
    gh, gw = H // ps, W // ps
    # PatchembedSuper: Conv2d(k=ps, stride=ps) == matmul over flattened patches.
    patches = x.reshape(B, C, gh, ps, gw, ps)
    patches = patches.transpose(0, 2, 4, 1, 3, 5).reshape(B * gh * gw, C * ps * ps)
    D = params['patch_w'].shape[1]
    emb = patch_embed(patches.astype(jnp.bfloat16), params['patch_w'], params['patch_b'])
    emb = emb.reshape(B, gh * gw, D)

    cls_tok = jnp.broadcast_to(params['cls_token'], (B, 1, D))
    tokens = jnp.concatenate([cls_tok, emb], axis=1) + params['pos_embed']   # abs_pos=True
    N = tokens.shape[1]

    # pad sequence to a multiple of 16 so every per-batch row slice inside the
    # fused kernel is tile-aligned; padded key positions are masked in softmax.
    Np = _round_up(N, 16)
    if Np != N:
        tokens = jnp.pad(tokens, ((0, 0), (0, Np - N), (0, 0)))
    tokens_flat = tokens.reshape(B * Np, D)

    logits_pad = encoder_stack(tokens_flat, params, num_heads=num_heads,
                               seq=Np, seq_valid=N, batch=B)
    return logits_pad[:, :num_classes]


# ----------------------------- main -----------------------------------------

if __name__ == "__main__":
    # small shapes consistent with the module
    B, C, H, W = 2, 4, 16, 16
    patch_size = 4
    embed_dim = 32
    depth = 2
    num_heads = 4
    mlp_ratio = 4.0
    num_classes = 10
    num_patches = (H // patch_size) * (W // patch_size)       # 16 patches, N = 17

    key = jax.random.PRNGKey(0)
    k_x, k_p = jax.random.split(key)
    x = jax.random.normal(k_x, (B, C, H, W), dtype=jnp.float32)
    params = init_params(k_p, in_chans=C, patch_size=patch_size, embed_dim=embed_dim,
                         depth=depth, mlp_ratio=mlp_ratio, num_classes=num_classes,
                         num_patches=num_patches, num_heads=num_heads)

    fwd = jax.jit(functools.partial(vit_super_forward, patch_size=patch_size,
                                    num_heads=num_heads, num_classes=num_classes))
    out = fwd(x, params)
    jax.block_until_ready(out)
    assert out.shape == (B, num_classes)
    assert bool(jnp.all(jnp.isfinite(out)))
    print("KERNEL_OK")
</pallas_src>

<mosaic_0001>
module attributes {stable_mosaic.version = 11 : i64} {
  func.func @_patch_embed_kernel(%arg0: i32, %arg1: memref<32x64xbf16, #tpu.memory_space<vmem>>, %arg2: memref<64x32xbf16, #tpu.memory_space<vmem>>, %arg3: memref<1x32xf32, #tpu.memory_space<vmem>>, %arg4: memref<32x32xf32, #tpu.memory_space<vmem>>) attributes {dimension_semantics = [#tpu.dimension_semantics<parallel>], iteration_bounds = array<i64: 1>, scalar_prefetch = 0 : i64, scratch_operands = 0 : i64, tpu.core_type = #tpu.core_type<tc>, window_params = [{transform_indices = @transform_0, window_bounds = array<i64: 32, 64>}, {pipeline_mode = #tpu.pipeline_mode<synchronous>, transform_indices = @transform_1, window_bounds = array<i64: 64, 32>}, {pipeline_mode = #tpu.pipeline_mode<synchronous>, transform_indices = @transform_2, window_bounds = array<i64: 1, 32>}, {transform_indices = @transform_3, window_bounds = array<i64: 32, 32>}]} {
    %c0 = arith.constant 0 : index
    %c0_0 = arith.constant 0 : index
    %0 = vector.load %arg1[%c0, %c0_0] : memref<32x64xbf16, #tpu.memory_space<vmem>>, vector<32x64xbf16>
    %c0_1 = arith.constant 0 : index
    %c0_2 = arith.constant 0 : index
    %1 = vector.load %arg2[%c0_1, %c0_2] : memref<64x32xbf16, #tpu.memory_space<vmem>>, vector<64x32xbf16>
    %cst = arith.constant dense<0.000000e+00> : vector<32x32xf32>
    %2 = tpu.matmul %0, %1, %cst {dimension_numbers = #tpu.dot_dimension_numbers<[1], [0], [0], [1], [0, 0, 1, 1], [], []>} : vector<32x64xbf16>, vector<64x32xbf16>, vector<32x32xf32> -> vector<32x32xf32>
    %c0_3 = arith.constant 0 : index
    %c0_4 = arith.constant 0 : index
    %3 = vector.load %arg3[%c0_3, %c0_4] : memref<1x32xf32, #tpu.memory_space<vmem>>, vector<1x32xf32>
    %4 = vector.broadcast %3 : vector<1x32xf32> to vector<32x32xf32>
    %5 = arith.addf %2, %4 : vector<32x32xf32>
    %c0_5 = arith.constant 0 : index
    %c0_6 = arith.constant 0 : index
    %6 = vector.load %arg4[%c0_5, %c0_6] : memref<32x32xf32, #tpu.memory_space<vmem>>, vector<32x32xf32>
    tpu.vector_store %arg4[%c0_5, %c0_6], %5 {strides = array<i32>} : memref<32x32xf32, #tpu.memory_space<vmem>>, vector<32x32xf32>,
    return
  }
  func.func @transform_0(%arg0: i32) -> (i32, i32) {
    %c0_i32 = arith.constant 0 : i32
    %c0_i32_0 = arith.constant 0 : i32
    return %arg0, %c0_i32 : i32, i32
  }
  func.func @transform_1(%arg0: i32) -> (i32, i32) {
    %c0_i32 = arith.constant 0 : i32
    %c0_i32_0 = arith.constant 0 : i32
    %c0_i32_1 = arith.constant 0 : i32
    return %c0_i32, %c0_i32_0 : i32, i32
  }
  func.func @transform_2(%arg0: i32) -> (i32, i32) {
    %c0_i32 = arith.constant 0 : i32
    %c0_i32_0 = arith.constant 0 : i32
    %c0_i32_1 = arith.constant 0 : i32
    return %c0_i32, %c0_i32_0 : i32, i32
  }
  func.func @transform_3(%arg0: i32) -> (i32, i32) {
    %c0_i32 = arith.constant 0 : i32
    %c0_i32_0 = arith.constant 0 : i32
    return %arg0, %c0_i32 : i32, i32
  }
}

module attributes {stable_mosaic.version = 11 : i64} {
  func.func @_encoder_stack_kernel(%arg0: i32, %arg1: i32, %arg2: memref<64x32xf32, #tpu.memory_space<vmem>>, %arg3: memref<1x1x32xf32, #tpu.memory_space<vmem>>, %arg4: memref<1x1x32xf32, #tpu.memory_space<vmem>>, %arg5: memref<1x32x96xbf16, #tpu.memory_space<vmem>>, %arg6: memref<1x32x32xbf16, #tpu.memory_space<vmem>>, %arg7: memref<1x1x32xf32, #tpu.memory_space<vmem>>, %arg8: memref<1x1x32xf32, #tpu.memory_space<vmem>>, %arg9: memref<1x1x32xf32, #tpu.memory_space<vmem>>, %arg10: memref<1x32x128xbf16, #tpu.memory_space<vmem>>, %arg11: memref<1x1x128xf32, #tpu.memory_space<vmem>>, %arg12: memref<1x128x32xbf16, #tpu.memory_space<vmem>>, %arg13: memref<1x1x32xf32, #tpu.memory_space<vmem>>, %arg14: memref<1x32xf32, #tpu.memory_space<vmem>>, %arg15: memref<1x32xf32, #tpu.memory_space<vmem>>, %arg16: memref<32x128xbf16, #tpu.memory_space<vmem>>, %arg17: memref<1x128xf32, #tpu.memory_space<vmem>>, %arg18: memref<1x2x128xf32, #tpu.memory_space<vmem>>, %arg19: memref<64x32xf32, #tpu.memory_space<vmem>>, %arg20: memref<64x96xbf16, #tpu.memory_space<vmem>>, %arg21: memref<64x32xbf16, #tpu.memory_space<vmem>>) attributes {dimension_semantics = [#tpu.dimension_semantics<parallel>, #tpu.dimension_semantics<arbitrary>], iteration_bounds = array<i64: 1, 2>, scalar_prefetch = 0 : i64, scratch_operands = 3 : i64, tpu.core_type = #tpu.core_type<tc>, window_params = [{transform_indices = @transform_0, window_bounds = array<i64: 64, 32>}, {transform_indices = @transform_1, window_bounds = array<i64: 1, 1, 32>}, {transform_indices = @transform_2, window_bounds = array<i64: 1, 1, 32>}, {transform_indices = @transform_3, window_bounds = array<i64: 1, 32, 96>}, {transform_indices = @transform_4, window_bounds = array<i64: 1, 32, 32>}, {transform_indices = @transform_5, window_bounds = array<i64: 1, 1, 32>}, {transform_indices = @transform_6, window_bounds = array<i64: 1, 1, 32>}, {transform_indices = @transform_7, window_bounds = array<i64: 1, 1, 32>}, {transform_indices = @transform_8, window_bounds = array<i64: 1, 32, 128>}, {transform_indices = @transform_9, window_bounds = array<i64: 1, 1, 128>}, {transform_indices = @transform_10, window_bounds = array<i64: 1, 128, 32>}, {transform_indices = @transform_11, window_bounds = array<i64: 1, 1, 32>}, {pipeline_mode = #tpu.pipeline_mode<synchronous>, transform_indices = @transform_12, window_bounds = array<i64: 1, 32>}, {pipeline_mode = #tpu.pipeline_mode<synchronous>, transform_indices = @transform_13, window_bounds = array<i64: 1, 32>}, {pipeline_mode = #tpu.pipeline_mode<synchronous>, transform_indices = @transform_14, window_bounds = array<i64: 32, 128>}, {pipeline_mode = #tpu.pipeline_mode<synchronous>, transform_indices = @transform_15, window_bounds = array<i64: 1, 128>}, {transform_indices = @transform_16, window_bounds = array<i64: 1, 2, 128>}]} {
    %c0_i32 = arith.constant 0 : i32
    %0 = arith.cmpi eq, %arg1, %c0_i32 : i32
    %1 = arith.extui %0 : i1 to i32
    %c0_i32_0 = arith.constant 0 : i32
    %2 = arith.cmpi ne, %1, %c0_i32_0 : i32
    scf.if %2 {
      %c0_64 = arith.constant 0 : index
      %c0_65 = arith.constant 0 : index
      %112 = vector.load %arg2[%c0_64, %c0_65] : memref<64x32xf32, #tpu.memory_space<vmem>>, vector<64x32xf32>
      %c0_66 = arith.constant 0 : index
      %c0_67 = arith.constant 0 : index
      %113 = vector.load %arg19[%c0_66, %c0_67] : memref<64x32xf32, #tpu.memory_space<vmem>>, vector<64x32xf32>
      tpu.vector_store %arg19[%c0_66, %c0_67], %112 {strides = array<i32>} : memref<64x32xf32, #tpu.memory_space<vmem>>, vector<64x32xf32>,
    } else {
    }
    %c0 = arith.constant 0 : index
    %c0_1 = arith.constant 0 : index
    %3 = vector.load %arg19[%c0, %c0_1] : memref<64x32xf32, #tpu.memory_space<vmem>>, vector<64x32xf32>
    %c0_2 = arith.constant 0 : index
    %c0_3 = arith.constant 0 : index
    %c0_4 = arith.constant 0 : index
    %4 = vector.load %arg3[%c0_2, %c0_3, %c0_4] : memref<1x1x32xf32, #tpu.memory_space<vmem>>, vector<1x1x32xf32>
    %5 = vector.shape_cast %4 : vector<1x1x32xf32> to vector<1x32xf32>
    %c0_5 = arith.constant 0 : index
    %c0_6 = arith.constant 0 : index
    %c0_7 = arith.constant 0 : index
    %6 = vector.load %arg4[%c0_5, %c0_6, %c0_7] : memref<1x1x32xf32, #tpu.memory_space<vmem>>, vector<1x1x32xf32>
    %7 = vector.shape_cast %6 : vector<1x1x32xf32> to vector<1x32xf32>
    %cst = arith.constant dense<0.000000e+00> : vector<64xf32>
    %8 = vector.multi_reduction <add>, %3, %cst [1] : vector<64x32xf32> to vector<64xf32>
    %9 = vector.shape_cast %8 : vector<64xf32> to vector<64x1xf32>
    %cst_8 = arith.constant 3.200000e+01 : f32
    %10 = vector.broadcast %cst_8 : f32 to vector<64x1xf32>
    %11 = arith.divf %9, %10 : vector<64x1xf32>
    %12 = vector.broadcast %11 : vector<64x1xf32> to vector<64x32xf32>
    %13 = arith.subf %3, %12 : vector<64x32xf32>
    %14 = arith.mulf %13, %13 : vector<64x32xf32>
    %cst_9 = arith.constant dense<0.000000e+00> : vector<64xf32>
    %15 = vector.multi_reduction <add>, %14, %cst_9 [1] : vector<64x32xf32> to vector<64xf32>
    %16 = vector.shape_cast %15 : vector<64xf32> to vector<64x1xf32>
    %cst_10 = arith.constant 3.200000e+01 : f32
    %17 = vector.broadcast %cst_10 : f32 to vector<64x1xf32>
    %18 = arith.divf %16, %17 : vector<64x1xf32>
    %19 = vector.broadcast %11 : vector<64x1xf32> to vector<64x32xf32>
    %20 = arith.subf %3, %19 : vector<64x32xf32>
    %cst_11 = arith.constant 9.99999974E-6 : f32
    %21 = vector.broadcast %cst_11 : f32 to vector<64x1xf32>
    %22 = arith.addf %18, %21 : vector<64x1xf32>
    %23 = math.rsqrt %22 : vector<64x1xf32>
    %24 = vector.broadcast %23 : vector<64x1xf32> to vector<64x32xf32>
    %25 = arith.mulf %20, %24 : vector<64x32xf32>
    %26 = vector.broadcast %5 : vector<1x32xf32> to vector<64x32xf32>
    %27 = arith.mulf %25, %26 : vector<64x32xf32>
    %28 = vector.broadcast %7 : vector<1x32xf32> to vector<64x32xf32>
    %29 = arith.addf %27, %28 : vector<64x32xf32>
    %30 = arith.truncf %29 : vector<64x32xf32> to vector<64x32xbf16>
    %c0_12 = arith.constant 0 : index
    %c0_13 = arith.constant 0 : index
    %c0_14 = arith.constant 0 : index
    %31 = vector.load %arg5[%c0_12, %c0_13, %c0_14] : memref<1x32x96xbf16, #tpu.memory_space<vmem>>, vector<1x32x96xbf16>
    %32 = vector.shape_cast %31 : vector<1x32x96xbf16> to vector<32x96xbf16>
    %cst_15 = arith.constant dense<0.000000e+00> : vector<64x96xf32>
    %33 = tpu.matmul %30, %32, %cst_15 {dimension_numbers = #tpu.dot_dimension_numbers<[1], [0], [0], [1], [0, 0, 1, 1], [], []>} : vector<64x32xbf16>, vector<32x96xbf16>, vector<64x96xf32> -> vector<64x96xf32>
    %34 = arith.truncf %33 : vector<64x96xf32> to vector<64x96xbf16>
    %c0_16 = arith.constant 0 : index
    %c0_17 = arith.constant 0 : index
    %35 = vector.load %arg20[%c0_16, %c0_17] : memref<64x96xbf16, #tpu.memory_space<vmem>>, vector<64x96xbf16>
    tpu.vector_store %arg20[%c0_16, %c0_17], %34 {strides = array<i32>} : memref<64x96xbf16, #tpu.memory_space<vmem>>, vector<64x96xbf16>,
    %36 = tpu.iota {dimensions = array<i32: 1>} : vector<1x32xi32>
    %c17_i32 = arith.constant 17 : i32
    %37 = vector.broadcast %c17_i32 : i32 to vector<1x32xi32>
    %38 = arith.cmpi slt, %36, %37 : vector<1x32xi32>
    %cst_18 = arith.constant 0.000000e+00 : f32
    %cst_19 = arith.constant -1.000000e+30 : f32
    %39 = vector.broadcast %cst_18 : f32 to vector<1x32xf32>
    %40 = vector.broadcast %cst_19 : f32 to vector<1x32xf32>
    %41 = arith.select %38, %39, %40 : vector<1x32xi1>, vector<1x32xf32>
    %c0_i32_20 = arith.constant 0 : i32
    %c2_i32 = arith.constant 2 : i32
    %42 = arith.addi %c0_i32_20, %c2_i32 : i32
    %c1_i32 = arith.constant 1 : i32
    scf.for %arg22 = %c0_i32_20 to %42 step %c1_i32  : i32 {
      %c32_i32 = arith.constant 32 : i32
      %112 = arith.muli %arg22, %c32_i32 : i32
      %113 = tpu.assume_multiple %112, 16 : i32
      %114 = arith.index_cast %113 : i32 to index
      %c0_64 = arith.constant 0 : index
      %115 = vector.load %arg20[%114, %c0_64] : memref<64x96xbf16, #tpu.memory_space<vmem>>, vector<32x8xbf16>
      %116 = arith.index_cast %113 : i32 to index
      %c32 = arith.constant 32 : index
      %117 = vector.load %arg20[%116, %c32] : memref<64x96xbf16, #tpu.memory_space<vmem>>, vector<32x8xbf16>
      %118 = arith.index_cast %113 : i32 to index
      %c64 = arith.constant 64 : index
      %119 = vector.load %arg20[%118, %c64] : memref<64x96xbf16, #tpu.memory_space<vmem>>, vector<32x8xbf16>
      %cst_65 = arith.constant dense<0.000000e+00> : vector<32x32xf32>
      %120 = tpu.matmul %115, %117, %cst_65 {dimension_numbers = #tpu.dot_dimension_numbers<[1], [1], [0], [0], [0, 0, 1, 0], [], []>} : vector<32x8xbf16>, vector<32x8xbf16>, vector<32x32xf32> -> vector<32x32xf32>
      %121 = vector.broadcast %41 : vector<1x32xf32> to vector<32x32xf32>
      %122 = arith.addf %120, %121 : vector<32x32xf32>
      %cst_66 = arith.constant dense<0xFF800000> : vector<32xf32>
      %123 = vector.multi_reduction <maximumf>, %122, %cst_66 [1] : vector<32x32xf32> to vector<32xf32>
      %124 = vector.shape_cast %123 : vector<32xf32> to vector<32x1xf32>
      %125 = vector.broadcast %124 : vector<32x1xf32> to vector<32x32xf32>
      %126 = arith.subf %122, %125 : vector<32x32xf32>
      %127 = math.exp %126 : vector<32x32xf32>
      %cst_67 = arith.constant dense<0.000000e+00> : vector<32xf32>
      %128 = vector.multi_reduction <add>, %127, %cst_67 [1] : vector<32x32xf32> to vector<32xf32>
      %129 = vector.shape_cast %128 : vector<32xf32> to vector<32x1xf32>
      %130 = tpu.reciprocal %129 {approx = true} : vector<32x1xf32> -> vector<32x1xf32>
      %131 = vector.broadcast %130 : vector<32x1xf32> to vector<32x32xf32>
      %132 = arith.mulf %127, %131 : vector<32x32xf32>
      %133 = arith.truncf %132 : vector<32x32xf32> to vector<32x32xbf16>
      %cst_68 = arith.constant dense<0.000000e+00> : vector<32x8xf32>
      %134 = tpu.matmul %133, %119, %cst_68 {dimension_numbers = #tpu.dot_dimension_numbers<[1], [0], [0], [1], [0, 0, 1, 1], [], []>} : vector<32x32xbf16>, vector<32x8xbf16>, vector<32x8xf32> -> vector<32x8xf32>
      %135 = arith.index_cast %113 : i32 to index
      %c8 = arith.constant 8 : index
      %136 = vector.load %arg20[%135, %c8] : memref<64x96xbf16, #tpu.memory_space<vmem>>, vector<32x8xbf16>
      %137 = arith.index_cast %113 : i32 to index
      %c40 = arith.constant 40 : index
      %138 = vector.load %arg20[%137, %c40] : memref<64x96xbf16, #tpu.memory_space<vmem>>, vector<32x8xbf16>
      %139 = arith.index_cast %113 : i32 to index
      %c72 = arith.constant 72 : index
      %140 = vector.load %arg20[%139, %c72] : memref<64x96xbf16, #tpu.memory_space<vmem>>, vector<32x8xbf16>
      %cst_69 = arith.constant dense<0.000000e+00> : vector<32x32xf32>
      %141 = tpu.matmul %136, %138, %cst_69 {dimension_numbers = #tpu.dot_dimension_numbers<[1], [1], [0], [0], [0, 0, 1, 0], [], []>} : vector<32x8xbf16>, vector<32x8xbf16>, vector<32x32xf32> -> vector<32x32xf32>
      %142 = vector.broadcast %41 : vector<1x32xf32> to vector<32x32xf32>
      %143 = arith.addf %141, %142 : vector<32x32xf32>
      %cst_70 = arith.constant dense<0xFF800000> : vector<32xf32>
      %144 = vector.multi_reduction <maximumf>, %143, %cst_70 [1] : vector<32x32xf32> to vector<32xf32>
      %145 = vector.shape_cast %144 : vector<32xf32> to vector<32x1xf32>
      %146 = vector.broadcast %145 : vector<32x1xf32> to vector<32x32xf32>
      %147 = arith.subf %143, %146 : vector<32x32xf32>
      %148 = math.exp %147 : vector<32x32xf32>
      %cst_71 = arith.constant dense<0.000000e+00> : vector<32xf32>
      %149 = vector.multi_reduction <add>, %148, %cst_71 [1] : vector<32x32xf32> to vector<32xf32>
      %150 = vector.shape_cast %149 : vector<32xf32> to vector<32x1xf32>
      %151 = tpu.reciprocal %150 {approx = true} : vector<32x1xf32> -> vector<32x1xf32>
      %152 = vector.broadcast %151 : vector<32x1xf32> to vector<32x32xf32>
      %153 = arith.mulf %148, %152 : vector<32x32xf32>
      %154 = arith.truncf %153 : vector<32x32xf32> to vector<32x32xbf16>
      %cst_72 = arith.constant dense<0.000000e+00> : vector<32x8xf32>
      %155 = tpu.matmul %154, %140, %cst_72 {dimension_numbers = #tpu.dot_dimension_numbers<[1], [0], [0], [1], [0, 0, 1, 1], [], []>} : vector<32x32xbf16>, vector<32x8xbf16>, vector<32x8xf32> -> vector<32x8xf32>
      %156 = arith.index_cast %113 : i32 to index
      %c16 = arith.constant 16 : index
      %157 = vector.load %arg20[%156, %c16] : memref<64x96xbf16, #tpu.memory_space<vmem>>, vector<32x8xbf16>
      %158 = arith.index_cast %113 : i32 to index
      %c48 = arith.constant 48 : index
      %159 = vector.load %arg20[%158, %c48] : memref<64x96xbf16, #tpu.memory_space<vmem>>, vector<32x8xbf16>
      %160 = arith.index_cast %113 : i32 to index
      %c80 = arith.constant 80 : index
      %161 = vector.load %arg20[%160, %c80] : memref<64x96xbf16, #tpu.memory_space<vmem>>, vector<32x8xbf16>
      %cst_73 = arith.constant dense<0.000000e+00> : vector<32x32xf32>
      %162 = tpu.matmul %157, %159, %cst_73 {dimension_numbers = #tpu.dot_dimension_numbers<[1], [1], [0], [0], [0, 0, 1, 0], [], []>} : vector<32x8xbf16>, vector<32x8xbf16>, vector<32x32xf32> -> vector<32x32xf32>
      %163 = vector.broadcast %41 : vector<1x32xf32> to vector<32x32xf32>
      %164 = arith.addf %162, %163 : vector<32x32xf32>
      %cst_74 = arith.constant dense<0xFF800000> : vector<32xf32>
      %165 = vector.multi_reduction <maximumf>, %164, %cst_74 [1] : vector<32x32xf32> to vector<32xf32>
      %166 = vector.shape_cast %165 : vector<32xf32> to vector<32x1xf32>
      %167 = vector.broadcast %166 : vector<32x1xf32> to vector<32x32xf32>
      %168 = arith.subf %164, %167 : vector<32x32xf32>
      %169 = math.exp %168 : vector<32x32xf32>
      %cst_75 = arith.constant dense<0.000000e+00> : vector<32xf32>
      %170 = vector.multi_reduction <add>, %169, %cst_75 [1] : vector<32x32xf32> to vector<32xf32>
      %171 = vector.shape_cast %170 : vector<32xf32> to vector<32x1xf32>
      %172 = tpu.reciprocal %171 {approx = true} : vector<32x1xf32> -> vector<32x1xf32>
      %173 = vector.broadcast %172 : vector<32x1xf32> to vector<32x32xf32>
      %174 = arith.mulf %169, %173 : vector<32x32xf32>
      %175 = arith.truncf %174 : vector<32x32xf32> to vector<32x32xbf16>
      %cst_76 = arith.constant dense<0.000000e+00> : vector<32x8xf32>
      %176 = tpu.matmul %175, %161, %cst_76 {dimension_numbers = #tpu.dot_dimension_numbers<[1], [0], [0], [1], [0, 0, 1, 1], [], []>} : vector<32x32xbf16>, vector<32x8xbf16>, vector<32x8xf32> -> vector<32x8xf32>
      %177 = arith.index_cast %113 : i32 to index
      %c24 = arith.constant 24 : index
      %178 = vector.load %arg20[%177, %c24] : memref<64x96xbf16, #tpu.memory_space<vmem>>, vector<32x8xbf16>
      %179 = arith.index_cast %113 : i32 to index
      %c56 = arith.constant 56 : index
      %180 = vector.load %arg20[%179, %c56] : memref<64x96xbf16, #tpu.memory_space<vmem>>, vector<32x8xbf16>
      %181 = arith.index_cast %113 : i32 to index
      %c88 = arith.constant 88 : index
      %182 = vector.load %arg20[%181, %c88] : memref<64x96xbf16, #tpu.memory_space<vmem>>, vector<32x8xbf16>
      %cst_77 = arith.constant dense<0.000000e+00> : vector<32x32xf32>
      %183 = tpu.matmul %178, %180, %cst_77 {dimension_numbers = #tpu.dot_dimension_numbers<[1], [1], [0], [0], [0, 0, 1, 0], [], []>} : vector<32x8xbf16>, vector<32x8xbf16>, vector<32x32xf32> -> vector<32x32xf32>
      %184 = vector.broadcast %41 : vector<1x32xf32> to vector<32x32xf32>
      %185 = arith.addf %183, %184 : vector<32x32xf32>
      %cst_78 = arith.constant dense<0xFF800000> : vector<32xf32>
      %186 = vector.multi_reduction <maximumf>, %185, %cst_78 [1] : vector<32x32xf32> to vector<32xf32>
      %187 = vector.shape_cast %186 : vector<32xf32> to vector<32x1xf32>
      %188 = vector.broadcast %187 : vector<32x1xf32> to vector<32x32xf32>
      %189 = arith.subf %185, %188 : vector<32x32xf32>
      %190 = math.exp %189 : vector<32x32xf32>
      %cst_79 = arith.constant dense<0.000000e+00> : vector<32xf32>
      %191 = vector.multi_reduction <add>, %190, %cst_79 [1] : vector<32x32xf32> to vector<32xf32>
      %192 = vector.shape_cast %191 : vector<32xf32> to vector<32x1xf32>
      %193 = tpu.reciprocal %192 {approx = true} : vector<32x1xf32> -> vector<32x1xf32>
      %194 = vector.broadcast %193 : vector<32x1xf32> to vector<32x32xf32>
      %195 = arith.mulf %190, %194 : vector<32x32xf32>
      %196 = arith.truncf %195 : vector<32x32xf32> to vector<32x32xbf16>
      %cst_80 = arith.constant dense<0.000000e+00> : vector<32x8xf32>
      %197 = tpu.matmul %196, %182, %cst_80 {dimension_numbers = #tpu.dot_dimension_numbers<[1], [0], [0], [1], [0, 0, 1, 1], [], []>} : vector<32x32xbf16>, vector<32x8xbf16>, vector<32x8xf32> -> vector<32x8xf32>
      %198 = tpu.concatenate %134, %155, %176, %197 in 1 : vector<32x8xf32>, vector<32x8xf32>, vector<32x8xf32>, vector<32x8xf32> -> vector<32x32xf32>
      %199 = arith.truncf %198 : vector<32x32xf32> to vector<32x32xbf16>
      %200 = arith.index_cast %113 : i32 to index
      %c0_81 = arith.constant 0 : index
      %201 = vector.load %arg21[%200, %c0_81] : memref<64x32xbf16, #tpu.memory_space<vmem>>, vector<32x32xbf16>
      tpu.vector_store %arg21[%200, %c0_81], %199 {strides = array<i32>} : memref<64x32xbf16, #tpu.memory_space<vmem>>, vector<32x32xbf16>,
    }
    %c2_i32_21 = arith.constant 2 : i32
    %c0_22 = arith.constant 0 : index
    %c0_23 = arith.constant 0 : index
    %43 = vector.load %arg21[%c0_22, %c0_23] : memref<64x32xbf16, #tpu.memory_space<vmem>>, vector<64x32xbf16>
    %c0_24 = arith.constant 0 : index
    %c0_25 = arith.constant 0 : index
    %c0_26 = arith.constant 0 : index
    %44 = vector.load %arg6[%c0_24, %c0_25, %c0_26] : memref<1x32x32xbf16, #tpu.memory_space<vmem>>, vector<1x32x32xbf16>
    %45 = vector.shape_cast %44 : vector<1x32x32xbf16> to vector<32x32xbf16>
    %cst_27 = arith.constant dense<0.000000e+00> : vector<64x32xf32>
    %46 = tpu.matmul %43, %45, %cst_27 {dimension_numbers = #tpu.dot_dimension_numbers<[1], [0], [0], [1], [0, 0, 1, 1], [], []>} : vector<64x32xbf16>, vector<32x32xbf16>, vector<64x32xf32> -> vector<64x32xf32>
    %c0_28 = arith.constant 0 : index
    %c0_29 = arith.constant 0 : index
    %c0_30 = arith.constant 0 : index
    %47 = vector.load %arg7[%c0_28, %c0_29, %c0_30] : memref<1x1x32xf32, #tpu.memory_space<vmem>>, vector<1x1x32xf32>
    %48 = vector.shape_cast %47 : vector<1x1x32xf32> to vector<1x32xf32>
    %49 = vector.broadcast %48 : vector<1x32xf32> to vector<64x32xf32>
    %50 = arith.addf %46, %49 : vector<64x32xf32>
    %51 = arith.addf %3, %50 : vector<64x32xf32>
    %c0_31 = arith.constant 0 : index
    %c0_32 = arith.constant 0 : index
    %c0_33 = arith.constant 0 : index
    %52 = vector.load %arg8[%c0_31, %c0_32, %c0_33] : memref<1x1x32xf32, #tpu.memory_space<vmem>>, vector<1x1x32xf32>
    %53 = vector.shape_cast %52 : vector<1x1x32xf32> to vector<1x32xf32>
    %c0_34 = arith.constant 0 : index
    %c0_35 = arith.constant 0 : index
    %c0_36 = arith.constant 0 : index
    %54 = vector.load %arg9[%c0_34, %c0_35, %c0_36] : memref<1x1x32xf32, #tpu.memory_space<vmem>>, vector<1x1x32xf32>
    %55 = vector.shape_cast %54 : vector<1x1x32xf32> to vector<1x32xf32>
    %cst_37 = arith.constant dense<0.000000e+00> : vector<64xf32>
    %56 = vector.multi_reduction <add>, %51, %cst_37 [1] : vector<64x32xf32> to vector<64xf32>
    %57 = vector.shape_cast %56 : vector<64xf32> to vector<64x1xf32>
    %cst_38 = arith.constant 3.200000e+01 : f32
    %58 = vector.broadcast %cst_38 : f32 to vector<64x1xf32>
    %59 = arith.divf %57, %58 : vector<64x1xf32>
    %60 = vector.broadcast %59 : vector<64x1xf32> to vector<64x32xf32>
    %61 = arith.subf %51, %60 : vector<64x32xf32>
    %62 = arith.mulf %61, %61 : vector<64x32xf32>
    %cst_39 = arith.constant dense<0.000000e+00> : vector<64xf32>
    %63 = vector.multi_reduction <add>, %62, %cst_39 [1] : vector<64x32xf32> to vector<64xf32>
    %64 = vector.shape_cast %63 : vector<64xf32> to vector<64x1xf32>
    %cst_40 = arith.constant 3.200000e+01 : f32
    %65 = vector.broadcast %cst_40 : f32 to vector<64x1xf32>
    %66 = arith.divf %64, %65 : vector<64x1xf32>
    %67 = vector.broadcast %59 : vector<64x1xf32> to vector<64x32xf32>
    %68 = arith.subf %51, %67 : vector<64x32xf32>
    %cst_41 = arith.constant 9.99999974E-6 : f32
    %69 = vector.broadcast %cst_41 : f32 to vector<64x1xf32>
    %70 = arith.addf %66, %69 : vector<64x1xf32>
    %71 = math.rsqrt %70 : vector<64x1xf32>
    %72 = vector.broadcast %71 : vector<64x1xf32> to vector<64x32xf32>
    %73 = arith.mulf %68, %72 : vector<64x32xf32>
    %74 = vector.broadcast %53 : vector<1x32xf32> to vector<64x32xf32>
    %75 = arith.mulf %73, %74 : vector<64x32xf32>
    %76 = vector.broadcast %55 : vector<1x32xf32> to vector<64x32xf32>
    %77 = arith.addf %75, %76 : vector<64x32xf32>
    %78 = arith.truncf %77 : vector<64x32xf32> to vector<64x32xbf16>
    %c0_42 = arith.constant 0 : index
    %c0_43 = arith.constant 0 : index
    %c0_44 = arith.constant 0 : index
    %79 = vector.load %arg10[%c0_42, %c0_43, %c0_44] : memref<1x32x128xbf16, #tpu.memory_space<vmem>>, vector<1x32x128xbf16>
    %80 = vector.shape_cast %79 : vector<1x32x128xbf16> to vector<32x128xbf16>
    %cst_45 = arith.constant dense<0.000000e+00> : vector<64x128xf32>
    %81 = tpu.matmul %78, %80, %cst_45 {dimension_numbers = #tpu.dot_dimension_numbers<[1], [0], [0], [1], [0, 0, 1, 1], [], []>} : vector<64x32xbf16>, vector<32x128xbf16>, vector<64x128xf32> -> vector<64x128xf32>
    %c0_46 = arith.constant 0 : index
    %c0_47 = arith.constant 0 : index
    %c0_48 = arith.constant 0 : index
    %82 = vector.load %arg11[%c0_46, %c0_47, %c0_48] : memref<1x1x128xf32, #tpu.memory_space<vmem>>, vector<1x1x128xf32>
    %83 = vector.shape_cast %82 : vector<1x1x128xf32> to vector<1x128xf32>
    %84 = vector.broadcast %83 : vector<1x128xf32> to vector<64x128xf32>
    %85 = arith.addf %81, %84 : vector<64x128xf32>
    %cst_49 = arith.constant 5.000000e-01 : f32
    %86 = vector.broadcast %cst_49 : f32 to vector<64x128xf32>
    %87 = arith.mulf %86, %85 : vector<64x128xf32>
    %cst_50 = arith.constant 4.471500e-02 : f32
    %88 = vector.broadcast %cst_50 : f32 to vector<64x128xf32>
    %89 = arith.mulf %88, %85 : vector<64x128xf32>
    %90 = arith.mulf %89, %85 : vector<64x128xf32>
    %91 = arith.mulf %90, %85 : vector<64x128xf32>
    %92 = arith.addf %85, %91 : vector<64x128xf32>
    %cst_51 = arith.constant 0.797884583 : f32
    %93 = vector.broadcast %cst_51 : f32 to vector<64x128xf32>
    %94 = arith.mulf %93, %92 : vector<64x128xf32>
    %95 = math.tanh %94 : vector<64x128xf32>
    %cst_52 = arith.constant 1.000000e+00 : f32
    %96 = vector.broadcast %cst_52 : f32 to vector<64x128xf32>
    %97 = arith.addf %96, %95 : vector<64x128xf32>
    %98 = arith.mulf %87, %97 : vector<64x128xf32>
    %99 = arith.truncf %98 : vector<64x128xf32> to vector<64x128xbf16>
    %c0_53 = arith.constant 0 : index
    %c0_54 = arith.constant 0 : index
    %c0_55 = arith.constant 0 : index
    %100 = vector.load %arg12[%c0_53, %c0_54, %c0_55] : memref<1x128x32xbf16, #tpu.memory_space<vmem>>, vector<1x128x32xbf16>
    %101 = vector.shape_cast %100 : vector<1x128x32xbf16> to vector<128x32xbf16>
    %cst_56 = arith.constant dense<0.000000e+00> : vector<64x32xf32>
    %102 = tpu.matmul %99, %101, %cst_56 {dimension_numbers = #tpu.dot_dimension_numbers<[1], [0], [0], [1], [0, 0, 1, 1], [], []>} : vector<64x128xbf16>, vector<128x32xbf16>, vector<64x32xf32> -> vector<64x32xf32>
    %c0_57 = arith.constant 0 : index
    %c0_58 = arith.constant 0 : index
    %c0_59 = arith.constant 0 : index
    %103 = vector.load %arg13[%c0_57, %c0_58, %c0_59] : memref<1x1x32xf32, #tpu.memory_space<vmem>>, vector<1x1x32xf32>
    %104 = vector.shape_cast %103 : vector<1x1x32xf32> to vector<1x32xf32>
    %105 = vector.broadcast %104 : vector<1x32xf32> to vector<64x32xf32>
    %106 = arith.addf %102, %105 : vector<64x32xf32>
    %107 = arith.addf %51, %106 : vector<64x32xf32>
    %c0_60 = arith.constant 0 : index
    %c0_61 = arith.constant 0 : index
    %108 = vector.load %arg19[%c0_60, %c0_61] : memref<64x32xf32, #tpu.memory_space<vmem>>, vector<64x32xf32>
    tpu.vector_store %arg19[%c0_60, %c0_61], %107 {strides = array<i32>} : memref<64x32xf32, #tpu.memory_space<vmem>>, vector<64x32xf32>,
    %c1_i32_62 = arith.constant 1 : i32
    %109 = arith.cmpi eq, %arg1, %c1_i32_62 : i32
    %110 = arith.extui %109 : i1 to i32
    %c0_i32_63 = arith.constant 0 : i32
    %111 = arith.cmpi ne, %110, %c0_i32_63 : i32
    scf.if %111 {
      %112 = vector.extract_strided_slice %107 {offsets = [0, 0], sizes = [1, 32], strides = [1, 1]} : vector<64x32xf32> to vector<1x32xf32>
      %113 = vector.extract_strided_slice %107 {offsets = [32, 0], sizes = [1, 32], strides = [1, 1]} : vector<64x32xf32> to vector<1x32xf32>
      %114 = tpu.concatenate %112, %113 in 0 : vector<1x32xf32>, vector<1x32xf32> -> vector<2x32xf32>
      %c0_64 = arith.constant 0 : index
      %c0_65 = arith.constant 0 : index
      %115 = vector.load %arg14[%c0_64, %c0_65] : memref<1x32xf32, #tpu.memory_space<vmem>>, vector<1x32xf32>
      %c0_66 = arith.constant 0 : index
      %c0_67 = arith.constant 0 : index
      %116 = vector.load %arg15[%c0_66, %c0_67] : memref<1x32xf32, #tpu.memory_space<vmem>>, vector<1x32xf32>
      %cst_68 = arith.constant dense<0.000000e+00> : vector<2xf32>
      %117 = vector.multi_reduction <add>, %114, %cst_68 [1] : vector<2x32xf32> to vector<2xf32>
      %118 = vector.shape_cast %117 : vector<2xf32> to vector<2x1xf32>
      %cst_69 = arith.constant 3.200000e+01 : f32
      %119 = vector.broadcast %cst_69 : f32 to vector<2x1xf32>
      %120 = arith.divf %118, %119 : vector<2x1xf32>
      %121 = vector.broadcast %120 : vector<2x1xf32> to vector<2x32xf32>
      %122 = arith.subf %114, %121 : vector<2x32xf32>
      %123 = arith.mulf %122, %122 : vector<2x32xf32>
      %cst_70 = arith.constant dense<0.000000e+00> : vector<2xf32>
      %124 = vector.multi_reduction <add>, %123, %cst_70 [1] : vector<2x32xf32> to vector<2xf32>
      %125 = vector.shape_cast %124 : vector<2xf32> to vector<2x1xf32>
      %cst_71 = arith.constant 3.200000e+01 : f32
      %126 = vector.broadcast %cst_71 : f32 to vector<2x1xf32>
      %127 = arith.divf %125, %126 : vector<2x1xf32>
      %128 = vector.broadcast %120 : vector<2x1xf32> to vector<2x32xf32>
      %129 = arith.subf %114, %128 : vector<2x32xf32>
      %cst_72 = arith.constant 9.99999974E-6 : f32
      %130 = vector.broadcast %cst_72 : f32 to vector<2x1xf32>
      %131 = arith.addf %127, %130 : vector<2x1xf32>
      %132 = math.rsqrt %131 : vector<2x1xf32>
      %133 = vector.broadcast %132 : vector<2x1xf32> to vector<2x32xf32>
      %134 = arith.mulf %129, %133 : vector<2x32xf32>
      %135 = vector.broadcast %115 : vector<1x32xf32> to vector<2x32xf32>
      %136 = arith.mulf %134, %135 : vector<2x32xf32>
      %137 = vector.broadcast %116 : vector<1x32xf32> to vector<2x32xf32>
      %138 = arith.addf %136, %137 : vector<2x32xf32>
      %139 = arith.truncf %138 : vector<2x32xf32> to vector<2x32xbf16>
      %c0_73 = arith.constant 0 : index
      %c0_74 = arith.constant 0 : index
      %140 = vector.load %arg16[%c0_73, %c0_74] : memref<32x128xbf16, #tpu.memory_space<vmem>>, vector<32x128xbf16>
      %cst_75 = arith.constant dense<0.000000e+00> : vector<2x128xf32>
      %141 = tpu.matmul %139, %140, %cst_75 {dimension_numbers = #tpu.dot_dimension_numbers<[1], [0], [0], [1], [0, 0, 1, 1], [], []>} : vector<2x32xbf16>, vector<32x128xbf16>, vector<2x128xf32> -> vector<2x128xf32>
      %c0_76 = arith.constant 0 : index
      %c0_77 = arith.constant 0 : index
      %142 = vector.load %arg17[%c0_76, %c0_77] : memref<1x128xf32, #tpu.memory_space<vmem>>, vector<1x128xf32>
      %143 = vector.broadcast %142 : vector<1x128xf32> to vector<2x128xf32>
      %144 = arith.addf %141, %143 : vector<2x128xf32>
      %c0_78 = arith.constant 0 : index
      %c0_79 = arith.constant 0 : index
      %c0_80 = arith.constant 0 : index
      %145 = vector.load %arg18[%c0_78, %c0_79, %c0_80] : memref<1x2x128xf32, #tpu.memory_space<vmem>>, vector<1x2x128xf32>
      %146 = vector.shape_cast %145 : vector<1x2x128xf32> to vector<2x128xf32>
      %147 = vector.shape_cast %144 : vector<2x128xf32> to vector<1x2x128xf32>
      tpu.vector_store %arg18[%c0_78, %c0_79, %c0_80], %147 {strides = array<i32>} : memref<1x2x128xf32, #tpu.memory_space<vmem>>, vector<1x2x128xf32>,
    } else {
    }
    return
  }
  func.func @transform_0(%arg0: i32, %arg1: i32) -> (i32, i32) {
    %c0_i32 = arith.constant 0 : i32
    %c0_i32_0 = arith.constant 0 : i32
    return %arg0, %c0_i32 : i32, i32
  }
  func.func @transform_1(%arg0: i32, %arg1: i32) -> (i32, i32, i32) {
    %c0_i32 = arith.constant 0 : i32
    %c0_i32_0 = arith.constant 0 : i32
    %c0_i32_1 = arith.constant 0 : i32
    return %arg1, %c0_i32, %c0_i32_0 : i32, i32, i32
  }
  func.func @transform_2(%arg0: i32, %arg1: i32) -> (i32, i32, i32) {
    %c0_i32 = arith.constant 0 : i32
    %c0_i32_0 = arith.constant 0 : i32
    %c0_i32_1 = arith.constant 0 : i32
    return %arg1, %c0_i32, %c0_i32_0 : i32, i32, i32
  }
  func.func @transform_3(%arg0: i32, %arg1: i32) -> (i32, i32, i32) {
    %c0_i32 = arith.constant 0 : i32
    %c0_i32_0 = arith.constant 0 : i32
    %c0_i32_1 = arith.constant 0 : i32
    return %arg1, %c0_i32, %c0_i32_0 : i32, i32, i32
  }
  func.func @transform_4(%arg0: i32, %arg1: i32) -> (i32, i32, i32) {
    %c0_i32 = arith.constant 0 : i32
    %c0_i32_0 = arith.constant 0 : i32
    %c0_i32_1 = arith.constant 0 : i32
    return %arg1, %c0_i32, %c0_i32_0 : i32, i32, i32
  }
  func.func @transform_5(%arg0: i32, %arg1: i32) -> (i32, i32, i32) {
    %c0_i32 = arith.constant 0 : i32
    %c0_i32_0 = arith.constant 0 : i32
    %c0_i32_1 = arith.constant 0 : i32
    return %arg1, %c0_i32, %c0_i32_0 : i32, i32, i32
  }
  func.func @transform_6(%arg0: i32, %arg1: i32) -> (i32, i32, i32) {
    %c0_i32 = arith.constant 0 : i32
    %c0_i32_0 = arith.constant 0 : i32
    %c0_i32_1 = arith.constant 0 : i32
    return %arg1, %c0_i32, %c0_i32_0 : i32, i32, i32
  }
  func.func @transform_7(%arg0: i32, %arg1: i32) -> (i32, i32, i32) {
    %c0_i32 = arith.constant 0 : i32
    %c0_i32_0 = arith.constant 0 : i32
    %c0_i32_1 = arith.constant 0 : i32
    return %arg1, %c0_i32, %c0_i32_0 : i32, i32, i32
  }
  func.func @transform_8(%arg0: i32, %arg1: i32) -> (i32, i32, i32) {
    %c0_i32 = arith.constant 0 : i32
    %c0_i32_0 = arith.constant 0 : i32
    %c0_i32_1 = arith.constant 0 : i32
    return %arg1, %c0_i32, %c0_i32_0 : i32, i32, i32
  }
  func.func @transform_9(%arg0: i32, %arg1: i32) -> (i32, i32, i32) {
    %c0_i32 = arith.constant 0 : i32
    %c0_i32_0 = arith.constant 0 : i32
    %c0_i32_1 = arith.constant 0 : i32
    return %arg1, %c0_i32, %c0_i32_0 : i32, i32, i32
  }
  func.func @transform_10(%arg0: i32, %arg1: i32) -> (i32, i32, i32) {
    %c0_i32 = arith.constant 0 : i32
    %c0_i32_0 = arith.constant 0 : i32
    %c0_i32_1 = arith.constant 0 : i32
    return %arg1, %c0_i32, %c0_i32_0 : i32, i32, i32
  }
  func.func @transform_11(%arg0: i32, %arg1: i32) -> (i32, i32, i32) {
    %c0_i32 = arith.constant 0 : i32
    %c0_i32_0 = arith.constant 0 : i32
    %c0_i32_1 = arith.constant 0 : i32
    return %arg1, %c0_i32, %c0_i32_0 : i32, i32, i32
  }
  func.func @transform_12(%arg0: i32, %arg1: i32) -> (i32, i32) {
    %c0_i32 = arith.constant 0 : i32
    %c0_i32_0 = arith.constant 0 : i32
    %c0_i32_1 = arith.constant 0 : i32
    return %c0_i32, %c0_i32_0 : i32, i32
  }
  func.func @transform_13(%arg0: i32, %arg1: i32) -> (i32, i32) {
    %c0_i32 = arith.constant 0 : i32
    %c0_i32_0 = arith.constant 0 : i32
    %c0_i32_1 = arith.constant 0 : i32
    return %c0_i32, %c0_i32_0 : i32, i32
  }
  func.func @transform_14(%arg0: i32, %arg1: i32) -> (i32, i32) {
    %c0_i32 = arith.constant 0 : i32
    %c0_i32_0 = arith.constant 0 : i32
    %c0_i32_1 = arith.constant 0 : i32
    return %c0_i32, %c0_i32_0 : i32, i32
  }
  func.func @transform_15(%arg0: i32, %arg1: i32) -> (i32, i32) {
    %c0_i32 = arith.constant 0 : i32
    %c0_i32_0 = arith.constant 0 : i32
    %c0_i32_1 = arith.constant 0 : i32
    return %c0_i32, %c0_i32_0 : i32, i32
  }
  func.func @transform_16(%arg0: i32, %arg1: i32) -> (i32, i32, i32) {
    %c0_i32 = arith.constant 0 : i32
    %c0_i32_0 = arith.constant 0 : i32
    %c0_i32_1 = arith.constant 0 : i32
    return %arg0, %c0_i32, %c0_i32_0 : i32, i32, i32
  }
}

</mosaic_0001>

<llo_original>
// kernel: vit_super_forward.2
$region0: #{vit_super_forward.2}
  #allocation0 [shape = 'u32[]', space=smem, size = 0x4, offset = 0x4, fixed_abs, tag = 'smem constant byte address 0x4 - core index']
  #allocation1 [shape = 'u32[72,128]{1,0:T(1,128)}', space=vmem, size = 0x9000, scoped, tag = 'internal scratch']
  %s0 = inlined_call_operand.vmem [shape: bf16[32,64], index: 0, kind: input, shape index: {}]
  %s1 = inlined_call_operand.vmem [shape: bf16[64,32], index: 1, kind: input, shape index: {}]
  %s2 = inlined_call_operand.vmem [shape: f32[1,32], index: 2, kind: input, shape index: {}]
  %s3 = inlined_call_operand.vmem [shape: f32[32,32], index: 3, kind: output, shape index: {}]
  %s4 = sld [smem:[#allocation0]]
  $region22: #{vit_super_forward.2} parent=0
    _
  %s6 = ssub.s32 1, %s4
  %s7 = scalar_select 0, %s6, %s4
  // Predicated region
  $region2: #{vit_super_forward.2} parent=0 // pred_check
    _
  $region3: #{vit_super_forward.2} parent=0 // pred_check_branch
    %9 = sbr.rel (0) target = $region5
  $region4: #{vit_super_forward.2} parent=0 // pred_region
    _
  $region5: #{vit_super_forward.2} parent=0 // pred_fallthru
    _
  // Predicated region
  $region6: #{vit_super_forward.2} parent=0 // pred_check
    _
  $region7: #{vit_super_forward.2} parent=0 // pred_check_branch
    %11 = sbr.rel (0) target = $region9
  $region8: #{vit_super_forward.2} parent=0 // pred_region
    _
  $region9: #{vit_super_forward.2} parent=0 // pred_fallthru
    _
  // Predicated region
  $region10: #{vit_super_forward.2} parent=0 // pred_check
    _
  $region11: #{vit_super_forward.2} parent=0 // pred_check_branch
    %13 = sbr.rel (0) target = $region13
  $region12: #{vit_super_forward.2} parent=0 // pred_region
    _
  $region13: #{vit_super_forward.2} parent=0 // pred_fallthru
    _
  %v15 = vld [vmem:[%s0] sm:$0xf]
  %v16 = vld [vmem:[%s0 + $0x4] sm:$0xf]
  %v17 = vld [vmem:[%s0 + $0x8] sm:$0xf]
  %v18 = vld [vmem:[%s0 + $0xc] sm:$0xf]
  %v19 = vld [vmem:[%s1] sm:$0xf]
  %v20 = vld [vmem:[%s1 + $0x4] sm:$0xf]
  %v21 = vld [vmem:[%s1 + $0x8] sm:$0xf]
  %v22 = vld [vmem:[%s1 + $0xc] sm:$0xf]
  %v23 = vld [vmem:[%s1 + $0x10] sm:$0xf]
  %v24 = vld [vmem:[%s1 + $0x14] sm:$0xf]
  %v25 = vld [vmem:[%s1 + $0x18] sm:$0xf]
  %v26 = vld [vmem:[%s1 + $0x1c] sm:$0xf]
  %v27 = vld [vmem:[%s2] sm:$0x1]
  %v29 = vperm.slane %v27, 0
  %v35 = vunpack.c.l.b16 %v15
  %v36 = vunpack.c.l.b16 %v16
  %v37 = vunpack.c.l.b16 %v17
  %v38 = vunpack.c.l.b16 %v18
  %v39 = vpack.c.b16 %v36, %v35
  %v40 = vpack.c.b16 %v38, %v37
  %v49 = vunpack.c.l.b16 %v19
  %v50 = vunpack.c.l.b16 %v20
  %v51 = vunpack.c.l.b16 %v21
  %v52 = vunpack.c.l.b16 %v22
  %v53 = vunpack.c.l.b16 %v23
  %v54 = vunpack.c.l.b16 %v24
  %v55 = vunpack.c.l.b16 %v25
  %v56 = vunpack.c.l.b16 %v26
  %v57 = vpack.c.b16 %v50, %v49
  %v58 = vpack.c.b16 %v52, %v51
  %v59 = vpack.c.b16 %v54, %v53
  %v60 = vpack.c.b16 %v56, %v55
  %vm65 = vcmask 523264
  %v67 = vsel %vm65, %v39, 0
  %v70 = vsel %vm65, %v40, 0
  %72 = vmatpush.bf16.msra.mxu0 0
  %73 = vmatpush.bf16.msra.mxu0 0
  %74 = vmatpush.bf16.msra.mxu0 0
  %75 = vmatpush.bf16.msra.mxu0 0
  %76 = vmatpush.bf16.msra.mxu0 %v60
  %77 = vmatpush.bf16.msra.mxu0 %v59
  %78 = vmatpush.bf16.msra.mxu0 %v58
  %79 = vmatpush.bf16.msra.mxu0 %v57
  %80 = vmatmul.bf16.gmra.mxu0 %v67
  %v81 = vpop.f32.mrf.mxu0
  %v82 = vadd.f32 %v29, %v81
  %v83 = vpop.f32.mrf.mxu0
  %v84 = vadd.f32 %v29, %v83
  %85 = vmatmul.bf16.gmra.mxu0 %v70
  %v86 = vpop.f32.mrf.mxu0
  %v87 = vadd.f32 %v29, %v86
  %v88 = vpop.f32.mrf.mxu0
  %v89 = vadd.f32 %v29, %v88
  %90 = vdwg.mxu0
  %vm91 = vcmask 261120
  %92 = vst.msk [vmem:[%s3] sm:$0xff] %vm91, %v82
  %93 = vst.msk [vmem:[%s3 + $0x8] sm:$0xff] %vm91, %v84
  %94 = vst.msk [vmem:[%s3 + $0x10] sm:$0xff] %vm91, %v87
  %95 = vst.msk [vmem:[%s3 + $0x18] sm:$0xff] %vm91, %v89
  // Predicated region
  $region14: #{vit_super_forward.2} parent=0 // pred_check
    _
  $region15: #{vit_super_forward.2} parent=0 // pred_check_branch
    %97 = sbr.rel (0) target = $region17
  $region16: #{vit_super_forward.2} parent=0 // pred_region
    _
  $region17: #{vit_super_forward.2} parent=0 // pred_fallthru
    _
  // Predicated region
  $region18: #{vit_super_forward.2} parent=0 // pred_check
    _
  $region19: #{vit_super_forward.2} parent=0 // pred_check_branch
    %99 = sbr.rel (0) target = $region21
  $region20: #{vit_super_forward.2} parent=0 // pred_region
    _
  $region21: #{vit_super_forward.2} parent=0 // pred_fallthru
    _

// kernel: vit_super_forward.3
$region0: #{vit_super_forward.3}
  #allocation0 [shape = 'u32[]', space=smem, size = 0x4, offset = 0x4, fixed_abs, tag = 'smem constant byte address 0x4 - core index']
  #allocation1 [shape = 'u32[72,128]{1,0:T(1,128)}', space=vmem, size = 0x9000, scoped, tag = 'internal scratch']
  #allocation2 [shape = 'f32[64,32]{1,0:T(8,128)}', space=vmem, size = 0x8000, scoped, tag = 'scratch operand']
  #allocation3 [shape = 'bf16[64,96]{1,0:T(8,128)(2,1)}', space=vmem, size = 0x4000, scoped, tag = 'scratch operand']
  #allocation4 [shape = 'bf16[64,32]{1,0:T(8,128)(2,1)}', space=vmem, size = 0x4000, scoped, tag = 'scratch operand']
  %s0 = inlined_call_operand.vmem [shape: f32[64,32], index: 0, kind: input, shape index: {}]
  %s1 = inlined_call_operand.vmem [shape: f32[2,1,32], index: 1, kind: input, shape index: {}]
  %s2 = inlined_call_operand.vmem [shape: f32[2,1,32], index: 2, kind: input, shape index: {}]
  %s3 = inlined_call_operand.vmem [shape: bf16[2,32,96], index: 3, kind: input, shape index: {}]
  %s4 = inlined_call_operand.vmem [shape: bf16[2,32,32], index: 4, kind: input, shape index: {}]
  %s5 = inlined_call_operand.vmem [shape: f32[2,1,32], index: 5, kind: input, shape index: {}]
  %s6 = inlined_call_operand.vmem [shape: f32[2,1,32], index: 6, kind: input, shape index: {}]
  %s7 = inlined_call_operand.vmem [shape: f32[2,1,32], index: 7, kind: input, shape index: {}]
  %s8 = inlined_call_operand.vmem [shape: bf16[2,32,128], index: 8, kind: input, shape index: {}]
  %s9 = inlined_call_operand.vmem [shape: f32[2,1,128], index: 9, kind: input, shape index: {}]
  %s10 = inlined_call_operand.vmem [shape: bf16[2,128,32], index: 10, kind: input, shape index: {}]
  %s11 = inlined_call_operand.vmem [shape: f32[2,1,32], index: 11, kind: input, shape index: {}]
  %s12 = inlined_call_operand.vmem [shape: f32[1,32], index: 12, kind: input, shape index: {}]
  %s13 = inlined_call_operand.vmem [shape: f32[1,32], index: 13, kind: input, shape index: {}]
  %s14 = inlined_call_operand.vmem [shape: bf16[32,128], index: 14, kind: input, shape index: {}]
  %s15 = inlined_call_operand.vmem [shape: f32[1,128], index: 15, kind: input, shape index: {}]
  %s16 = inlined_call_operand.hbm [shape: f32[1,2,128], index: 16, kind: output, shape index: {}]
  %s17 = sld [smem:[#allocation0]]
  $region112: #{vit_super_forward.3} parent=0
    _
  %s19 = ssub.s32 1, %s17
  %s20 = scalar_select 0, %s19, %s17
  $region1: #{vit_super_forward.3} parent=0
    #allocation5 [shape = 'u8[1024]{0}', space=vmem, size = 0x400, scoped, tag = 'output window, operand 0, single buffered']
    #allocation6 [shape = 's32[2]{0}', space=sflag, size = 0x8, scoped, tag = 'scoped memory for vit_super_forward.3']
    %21 = vsyncpa [#allocation6], 0
    loop: start=0, step=1, limit=4
    $region2: #{vit_super_forward.3} parent=1 // loop_pre_header
      _
    $region3: #{vit_super_forward.3} parent=1 // loop_header
      %s23 = sphi 0, %s27
      %p24 = scmp.ge.s32.totalorder %s23, 4
      %s30 = sphi 0, %s42
      %s31 = sphi 0, %s38
      %s32 = sphi 0, %s30
      %s33 = sphi 0, %s31
      %s34 = sphi 0, %s32
      %s35 = sphi 0, %s33
      %s45 = sphi 0, %s47
      %s48 = sphi 0, %s45
      %s49 = sphi 0, %s48
      %s65 = sphi 0, %s49
      %s71 = sphi 0, %s73
      %s74 = sphi 0, %s71
      %s75 = sphi 0, %s74
      %s91 = sphi 0, %s75
      %s97 = sphi 0, %s99
      %s100 = sphi 0, %s97
      %s101 = sphi 0, %s100
      %s117 = sphi 0, %s101
      %s123 = sphi 0, %s125
      %s126 = sphi 0, %s123
      %s127 = sphi 0, %s126
      %s143 = sphi 0, %s127
      %s149 = sphi 0, %s151
      %s152 = sphi 0, %s149
      %s153 = sphi 0, %s152
      %s169 = sphi 0, %s153
      %s175 = sphi 0, %s177
      %s178 = sphi 0, %s175
      %s179 = sphi 0, %s178
      %s195 = sphi 0, %s179
      %s201 = sphi 0, %s203
      %s204 = sphi 0, %s201
      %s205 = sphi 0, %s204
      %s221 = sphi 0, %s205
      %s227 = sphi 0, %s229
      %s230 = sphi 0, %s227
      %s231 = sphi 0, %s230
      %s247 = sphi 0, %s231
      %s253 = sphi 0, %s255
      %s256 = sphi 0, %s253
      %s257 = sphi 0, %s256
      %s273 = sphi 0, %s257
      %s279 = sphi 0, %s281
      %s282 = sphi 0, %s279
      %s283 = sphi 0, %s282
      %s299 = sphi 0, %s283
      %s305 = sphi 0, %s307
      %s308 = sphi 0, %s305
      %s309 = sphi 0, %s308
      %s325 = sphi 0, %s309
      %s331 = sphi 0, %s333
      %s334 = sphi 0, %s331
      %s335 = sphi 0, %s334
      %s351 = sphi 0, %s335
      %s355 = sphi 0, %s355
      %s357 = sphi 0, %s355
      %s358 = sphi 0, %s357
      %s372 = sphi 0, %s358
      %s376 = sphi 0, %s376
      %s378 = sphi 0, %s376
      %s379 = sphi 0, %s378
      %s393 = sphi 0, %s379
      %s397 = sphi 0, %s397
      %s399 = sphi 0, %s397
      %s400 = sphi 0, %s399
      %s414 = sphi 0, %s400
      %s418 = sphi 0, %s418
      %s420 = sphi 0, %s418
      %s421 = sphi 0, %s420
      %s435 = sphi 0, %s421
      %s441 = sphi 0, %s443
      %s444 = sphi 0, %s441
      %s445 = sphi 0, %s444
      %s461 = sphi 0, %s445
    $region4: #{vit_super_forward.3} parent=1 // loop_header_branch
      %26 = sbr.rel (%p24) target = $region8
    $region5: #{vit_super_forward.3} parent=1 // loop_body
      %s28 = ssub.s32 %s23, 1
      %s29 = ssub.s32 %s23, 2
      %s36 = sadd.s32 1, %s31
      %p37 = scmp.ge.s32.totalorder %s36, 2
      %s38 = scalar_select %p37, 0, %s36
      %s39 = sadd.s32 1, %s30
      %s40 = scalar_select %p37, %s39, %s30
      %p41 = scmp.ge.s32.totalorder %s40, 1
      %s42 = scalar_select %p41, 0, %s40
      %s43 = ssub.s32 %s30, %s42
      %p44 = scmp.eq.s32.totalorder %s43, 0
      %s46 = sadd.s32 %s45, 1
      %s47 = scalar_select %p44, %s45, %s46
      %p50 = pneg %p44
      %p51 = scmp.eq.s32.totalorder %s23, 1
      %p52 = por %p50, %p51
      %p53 = scmp.ne.s32.totalorder %s45, %s48
      %p54 = scmp.eq.s32.totalorder %s23, 0
      %p55 = por %p53, %p54
      %p56 = scmp.ne.s32.totalorder %s45, %s48
      %p57 = scmp.eq.s32.totalorder %s28, 1
      %p58 = por %p56, %p57
      %p59 = scmp.ne.s32.totalorder %s48, %s49
      %p60 = scmp.eq.s32.totalorder %s28, 0
      %p61 = por %p59, %p60
      %p62 = scmp.ne.s32.totalorder %s48, %s49
      %p63 = scmp.eq.s32.totalorder %s29, 1
      %p64 = por %p62, %p63
      %p66 = scmp.ne.s32.totalorder %s49, %s65
      %p67 = scmp.eq.s32.totalorder %s29, 0
      %p68 = por %p66, %p67
      %s69 = ssub.s32 %s31, %s38
      %p70 = scmp.eq.s32.totalorder %s69, 0
      %s72 = sadd.s32 %s71, 1
      %s73 = scalar_select %p70, %s71, %s72
      %p76 = pneg %p70
      %p77 = scmp.eq.s32.totalorder %s23, 1
      %p78 = por %p76, %p77
      %p79 = scmp.ne.s32.totalorder %s71, %s74
      %p80 = scmp.eq.s32.totalorder %s23, 0
      %p81 = por %p79, %p80
      %p82 = scmp.ne.s32.totalorder %s71, %s74
      %p83 = scmp.eq.s32.totalorder %s28, 1
      %p84 = por %p82, %p83
      %p85 = scmp.ne.s32.totalorder %s74, %s75
      %p86 = scmp.eq.s32.totalorder %s28, 0
      %p87 = por %p85, %p86
      %p88 = scmp.ne.s32.totalorder %s74, %s75
      %p89 = scmp.eq.s32.totalorder %s29, 1
      %p90 = por %p88, %p89
      %p92 = scmp.ne.s32.totalorder %s75, %s91
      %p93 = scmp.eq.s32.totalorder %s29, 0
      %p94 = por %p92, %p93
      %s95 = ssub.s32 %s31, %s38
      %p96 = scmp.eq.s32.totalorder %s95, 0
      %s98 = sadd.s32 %s97, 1
      %s99 = scalar_select %p96, %s97, %s98
      %p102 = pneg %p96
      %p103 = scmp.eq.s32.totalorder %s23, 1
      %p104 = por %p102, %p103
      %p105 = scmp.ne.s32.totalorder %s97, %s100
      %p106 = scmp.eq.s32.totalorder %s23, 0
      %p107 = por %p105, %p106
      %p108 = scmp.ne.s32.totalorder %s97, %s100
      %p109 = scmp.eq.s32.totalorder %s28, 1
      %p110 = por %p108, %p109
      %p111 = scmp.ne.s32.totalorder %s100, %s101
      %p112 = scmp.eq.s32.totalorder %s28, 0
      %p113 = por %p111, %p112
      %p114 = scmp.ne.s32.totalorder %s100, %s101
      %p115 = scmp.eq.s32.totalorder %s29, 1
      %p116 = por %p114, %p115
      %p118 = scmp.ne.s32.totalorder %s101, %s117
      %p119 = scmp.eq.s32.totalorder %s29, 0
      %p120 = por %p118, %p119
      %s121 = ssub.s32 %s31, %s38
      %p122 = scmp.eq.s32.totalorder %s121, 0
      %s124 = sadd.s32 %s123, 1
      %s125 = scalar_select %p122, %s123, %s124
      %p128 = pneg %p122
      %p129 = scmp.eq.s32.totalorder %s23, 1
      %p130 = por %p128, %p129
      %p131 = scmp.ne.s32.totalorder %s123, %s126
      %p132 = scmp.eq.s32.totalorder %s23, 0
      %p133 = por %p131, %p132
      %p134 = scmp.ne.s32.totalorder %s123, %s126
      %p135 = scmp.eq.s32.totalorder %s28, 1
      %p136 = por %p134, %p135
      %p137 = scmp.ne.s32.totalorder %s126, %s127
      %p138 = scmp.eq.s32.totalorder %s28, 0
      %p139 = por %p137, %p138
      %p140 = scmp.ne.s32.totalorder %s126, %s127
      %p141 = scmp.eq.s32.totalorder %s29, 1
      %p142 = por %p140, %p141
      %p144 = scmp.ne.s32.totalorder %s127, %s143
      %p145 = scmp.eq.s32.totalorder %s29, 0
      %p146 = por %p144, %p145
      %s147 = ssub.s32 %s31, %s38
      %p148 = scmp.eq.s32.totalorder %s147, 0
      %s150 = sadd.s32 %s149, 1
      %s151 = scalar_select %p148, %s149, %s150
      %p154 = pneg %p148
      %p155 = scmp.eq.s32.totalorder %s23, 1
      %p156 = por %p154, %p155
      %p157 = scmp.ne.s32.totalorder %s149, %s152
      %p158 = scmp.eq.s32.totalorder %s23, 0
      %p159 = por %p157, %p158
      %p160 = scmp.ne.s32.totalorder %s149, %s152
      %p161 = scmp.eq.s32.totalorder %s28, 1
      %p162 = por %p160, %p161
      %p163 = scmp.ne.s32.totalorder %s152, %s153
      %p164 = scmp.eq.s32.totalorder %s28, 0
      %p165 = por %p163, %p164
      %p166 = scmp.ne.s32.totalorder %s152, %s153
      %p167 = scmp.eq.s32.totalorder %s29, 1
      %p168 = por %p166, %p167
      %p170 = scmp.ne.s32.totalorder %s153, %s169
      %p171 = scmp.eq.s32.totalorder %s29, 0
      %p172 = por %p170, %p171
      %s173 = ssub.s32 %s31, %s38
      %p174 = scmp.eq.s32.totalorder %s173, 0
      %s176 = sadd.s32 %s175, 1
      %s177 = scalar_select %p174, %s175, %s176
      %p180 = pneg %p174
      %p181 = scmp.eq.s32.totalorder %s23, 1
      %p182 = por %p180, %p181
      %p183 = scmp.ne.s32.totalorder %s175, %s178
      %p184 = scmp.eq.s32.totalorder %s23, 0
      %p185 = por %p183, %p184
      %p186 = scmp.ne.s32.totalorder %s175, %s178
      %p187 = scmp.eq.s32.totalorder %s28, 1
      %p188 = por %p186, %p187
      %p189 = scmp.ne.s32.totalorder %s178, %s179
      %p190 = scmp.eq.s32.totalorder %s28, 0
      %p191 = por %p189, %p190
      %p192 = scmp.ne.s32.totalorder %s178, %s179
      %p193 = scmp.eq.s32.totalorder %s29, 1
      %p194 = por %p192, %p193
      %p196 = scmp.ne.s32.totalorder %s179, %s195
      %p197 = scmp.eq.s32.totalorder %s29, 0
      %p198 = por %p196, %p197
      %s199 = ssub.s32 %s31, %s38
      %p200 = scmp.eq.s32.totalorder %s199, 0
      %s202 = sadd.s32 %s201, 1
      %s203 = scalar_select %p200, %s201, %s202
      %p206 = pneg %p200
      %p207 = scmp.eq.s32.totalorder %s23, 1
      %p208 = por %p206, %p207
      %p209 = scmp.ne.s32.totalorder %s201, %s204
      %p210 = scmp.eq.s32.totalorder %s23, 0
      %p211 = por %p209, %p210
      %p212 = scmp.ne.s32.totalorder %s201, %s204
      %p213 = scmp.eq.s32.totalorder %s28, 1
      %p214 = por %p212, %p213
      %p215 = scmp.ne.s32.totalorder %s204, %s205
      %p216 = scmp.eq.s32.totalorder %s28, 0
      %p217 = por %p215, %p216
      %p218 = scmp.ne.s32.totalorder %s204, %s205
      %p219 = scmp.eq.s32.totalorder %s29, 1
      %p220 = por %p218, %p219
      %p222 = scmp.ne.s32.totalorder %s205, %s221
      %p223 = scmp.eq.s32.totalorder %s29, 0
      %p224 = por %p222, %p223
      %s225 = ssub.s32 %s31, %s38
      %p226 = scmp.eq.s32.totalorder %s225, 0
      %s228 = sadd.s32 %s227, 1
      %s229 = scalar_select %p226, %s227, %s228
      %p232 = pneg %p226
      %p233 = scmp.eq.s32.totalorder %s23, 1
      %p234 = por %p232, %p233
      %p235 = scmp.ne.s32.totalorder %s227, %s230
      %p236 = scmp.eq.s32.totalorder %s23, 0
      %p237 = por %p235, %p236
      %p238 = scmp.ne.s32.totalorder %s227, %s230
      %p239 = scmp.eq.s32.totalorder %s28, 1
      %p240 = por %p238, %p239
      %p241 = scmp.ne.s32.totalorder %s230, %s231
      %p242 = scmp.eq.s32.totalorder %s28, 0
      %p243 = por %p241, %p242
      %p244 = scmp.ne.s32.totalorder %s230, %s231
      %p245 = scmp.eq.s32.totalorder %s29, 1
      %p246 = por %p244, %p245
      %p248 = scmp.ne.s32.totalorder %s231, %s247
      %p249 = scmp.eq.s32.totalorder %s29, 0
      %p250 = por %p248, %p249
      %s251 = ssub.s32 %s31, %s38
      %p252 = scmp.eq.s32.totalorder %s251, 0
      %s254 = sadd.s32 %s253, 1
      %s255 = scalar_select %p252, %s253, %s254
      %p258 = pneg %p252
      %p259 = scmp.eq.s32.totalorder %s23, 1
      %p260 = por %p258, %p259
      %p261 = scmp.ne.s32.totalorder %s253, %s256
      %p262 = scmp.eq.s32.totalorder %s23, 0
      %p263 = por %p261, %p262
      %p264 = scmp.ne.s32.totalorder %s253, %s256
      %p265 = scmp.eq.s32.totalorder %s28, 1
      %p266 = por %p264, %p265
      %p267 = scmp.ne.s32.totalorder %s256, %s257
      %p268 = scmp.eq.s32.totalorder %s28, 0
      %p269 = por %p267, %p268
      %p270 = scmp.ne.s32.totalorder %s256, %s257
      %p271 = scmp.eq.s32.totalorder %s29, 1
      %p272 = por %p270, %p271
      %p274 = scmp.ne.s32.totalorder %s257, %s273
      %p275 = scmp.eq.s32.totalorder %s29, 0
      %p276 = por %p274, %p275
      %s277 = ssub.s32 %s31, %s38
      %p278 = scmp.eq.s32.totalorder %s277, 0
      %s280 = sadd.s32 %s279, 1
      %s281 = scalar_select %p278, %s279, %s280
      %p284 = pneg %p278
      %p285 = scmp.eq.s32.totalorder %s23, 1
      %p286 = por %p284, %p285
      %p287 = scmp.ne.s32.totalorder %s279, %s282
      %p288 = scmp.eq.s32.totalorder %s23, 0
      %p289 = por %p287, %p288
      %p290 = scmp.ne.s32.totalorder %s279, %s282
      %p291 = scmp.eq.s32.totalorder %s28, 1
      %p292 = por %p290, %p291
      %p293 = scmp.ne.s32.totalorder %s282, %s283
      %p294 = scmp.eq.s32.totalorder %s28, 0
      %p295 = por %p293, %p294
      %p296 = scmp.ne.s32.totalorder %s282, %s283
      %p297 = scmp.eq.s32.totalorder %s29, 1
      %p298 = por %p296, %p297
      %p300 = scmp.ne.s32.totalorder %s283, %s299
      %p301 = scmp.eq.s32.totalorder %s29, 0
      %p302 = por %p300, %p301
      %s303 = ssub.s32 %s31, %s38
      %p304 = scmp.eq.s32.totalorder %s303, 0
      %s306 = sadd.s32 %s305, 1
      %s307 = scalar_select %p304, %s305, %s306
      %p310 = pneg %p304
      %p311 = scmp.eq.s32.totalorder %s23, 1
      %p312 = por %p310, %p311
      %p313 = scmp.ne.s32.totalorder %s305, %s308
      %p314 = scmp.eq.s32.totalorder %s23, 0
      %p315 = por %p313, %p314
      %p316 = scmp.ne.s32.totalorder %s305, %s308
      %p317 = scmp.eq.s32.totalorder %s28, 1
      %p318 = por %p316, %p317
      %p319 = scmp.ne.s32.totalorder %s308, %s309
      %p320 = scmp.eq.s32.totalorder %s28, 0
      %p321 = por %p319, %p320
      %p322 = scmp.ne.s32.totalorder %s308, %s309
      %p323 = scmp.eq.s32.totalorder %s29, 1
      %p324 = por %p322, %p323
      %p326 = scmp.ne.s32.totalorder %s309, %s325
      %p327 = scmp.eq.s32.totalorder %s29, 0
      %p328 = por %p326, %p327
      %s329 = ssub.s32 %s31, %s38
      %p330 = scmp.eq.s32.totalorder %s329, 0
      %s332 = sadd.s32 %s331, 1
      %s333 = scalar_select %p330, %s331, %s332
      %p336 = pneg %p330
      %p337 = scmp.eq.s32.totalorder %s23, 1
      %p338 = por %p336, %p337
      %p339 = scmp.ne.s32.totalorder %s331, %s334
      %p340 = scmp.eq.s32.totalorder %s23, 0
      %p341 = por %p339, %p340
      %p342 = scmp.ne.s32.totalorder %s331, %s334
      %p343 = scmp.eq.s32.totalorder %s28, 1
      %p344 = por %p342, %p343
      %p345 = scmp.ne.s32.totalorder %s334, %s335
      %p346 = scmp.eq.s32.totalorder %s28, 0
      %p347 = por %p345, %p346
      %p348 = scmp.ne.s32.totalorder %s334, %s335
      %p349 = scmp.eq.s32.totalorder %s29, 1
      %p350 = por %p348, %p349
      %p352 = scmp.ne.s32.totalorder %s335, %s351
      %p353 = scmp.eq.s32.totalorder %s29, 0
      %p354 = por %p352, %p353
      %s356 = sadd.s32 %s355, 1
      %p359 = scmp.eq.s32.totalorder %s23, 1
      %p360 = scmp.ne.s32.totalorder %s355, %s357
      %p361 = scmp.eq.s32.totalorder %s23, 0
      %p362 = por %p360, %p361
      %p363 = scmp.ne.s32.totalorder %s355, %s357
      %p364 = scmp.eq.s32.totalorder %s28, 1
      %p365 = por %p363, %p364
      %p366 = scmp.ne.s32.totalorder %s357, %s358
      %p367 = scmp.eq.s32.totalorder %s28, 0
      %p368 = por %p366, %p367
      %p369 = scmp.ne.s32.totalorder %s357, %s358
      %p370 = scmp.eq.s32.totalorder %s29, 1
      %p371 = por %p369, %p370
      %p373 = scmp.ne.s32.totalorder %s358, %s372
      %p374 = scmp.eq.s32.totalorder %s29, 0
      %p375 = por %p373, %p374
      %s377 = sadd.s32 %s376, 1
      %p380 = scmp.eq.s32.totalorder %s23, 1
      %p381 = scmp.ne.s32.totalorder %s376, %s378
      %p382 = scmp.eq.s32.totalorder %s23, 0
      %p383 = por %p381, %p382
      %p384 = scmp.ne.s32.totalorder %s376, %s378
      %p385 = scmp.eq.s32.totalorder %s28, 1
      %p386 = por %p384, %p385
      %p387 = scmp.ne.s32.totalorder %s378, %s379
      %p388 = scmp.eq.s32.totalorder %s28, 0
      %p389 = por %p387, %p388
      %p390 = scmp.ne.s32.totalorder %s378, %s379
      %p391 = scmp.eq.s32.totalorder %s29, 1
      %p392 = por %p390, %p391
      %p394 = scmp.ne.s32.totalorder %s379, %s393
      %p395 = scmp.eq.s32.totalorder %s29, 0
      %p396 = por %p394, %p395
      %s398 = sadd.s32 %s397, 1
      %p401 = scmp.eq.s32.totalorder %s23, 1
      %p402 = scmp.ne.s32.totalorder %s397, %s399
      %p403 = scmp.eq.s32.totalorder %s23, 0
      %p404 = por %p402, %p403
      %p405 = scmp.ne.s32.totalorder %s397, %s399
      %p406 = scmp.eq.s32.totalorder %s28, 1
      %p407 = por %p405, %p406
      %p408 = scmp.ne.s32.totalorder %s399, %s400
      %p409 = scmp.eq.s32.totalorder %s28, 0
      %p410 = por %p408, %p409
      %p411 = scmp.ne.s32.totalorder %s399, %s400
      %p412 = scmp.eq.s32.totalorder %s29, 1
      %p413 = por %p411, %p412
      %p415 = scmp.ne.s32.totalorder %s400, %s414
      %p416 = scmp.eq.s32.totalorder %s29, 0
      %p417 = por %p415, %p416
      %s419 = sadd.s32 %s418, 1
      %p422 = scmp.eq.s32.totalorder %s23, 1
      %p423 = scmp.ne.s32.totalorder %s418, %s420
      %p424 = scmp.eq.s32.totalorder %s23, 0
      %p425 = por %p423, %p424
      %p426 = scmp.ne.s32.totalorder %s418, %s420
      %p427 = scmp.eq.s32.totalorder %s28, 1
      %p428 = por %p426, %p427
      %p429 = scmp.ne.s32.totalorder %s420, %s421
      %p430 = scmp.eq.s32.totalorder %s28, 0
      %p431 = por %p429, %p430
      %p432 = scmp.ne.s32.totalorder %s420, %s421
      %p433 = scmp.eq.s32.totalorder %s29, 1
      %p434 = por %p432, %p433
      %p436 = scmp.ne.s32.totalorder %s421, %s435
      %p437 = scmp.eq.s32.totalorder %s29, 0
      %p438 = por %p436, %p437
      %s439 = ssub.s32 %s30, %s42
      %p440 = scmp.eq.s32.totalorder %s439, 0
      %s442 = sadd.s32 %s441, 1
      %s443 = scalar_select %p440, %s441, %s442
      %p446 = pneg %p440
      %p447 = scmp.eq.s32.totalorder %s23, 1
      %p448 = por %p446, %p447
      %p449 = scmp.ne.s32.totalorder %s441, %s444
      %p450 = scmp.eq.s32.totalorder %s23, 0
      %p451 = por %p449, %p450
      %p452 = scmp.ne.s32.totalorder %s441, %s444
      %p453 = scmp.eq.s32.totalorder %s28, 1
      %p454 = por %p452, %p453
      %p455 = scmp.ne.s32.totalorder %s444, %s445
      %p456 = scmp.eq.s32.totalorder %s28, 0
      %p457 = por %p455, %p456
      %p458 = scmp.ne.s32.totalorder %s444, %s445
      %p459 = scmp.eq.s32.totalorder %s29, 1
      %p460 = por %p458, %p459
      %p462 = scmp.ne.s32.totalorder %s445, %s461
      %p463 = scmp.eq.s32.totalorder %s29, 0
      %p464 = por %p462, %p463
      %p465 = scmp.le.s32.totalorder 1, %s23
      %p466 = scmp.lt.s32.totalorder %s23, 3
      %p467 = pnand %p465, %p466
      %p468 = pneg %p467
      // Predicated region
      $region9: #{vit_super_forward.3} parent=5 // pred_check
        _
      $region10: #{vit_super_forward.3} parent=5 // pred_check_branch
        %470 = sbr.rel (%p467) target = $region12
      $region11: #{vit_super_forward.3} parent=5 // pred_region
        %s471 = ssub.s32 %s23, 1
        // Predicated region
        $region13: #{vit_super_forward.3} parent=11 // pred_check
          %p472 = pneg %p61
        $region14: #{vit_super_forward.3} parent=11 // pred_check_branch
          %474 = sbr.rel (%p472) target = $region16
        $region15: #{vit_super_forward.3} parent=11 // pred_region
          %s475 = smul.u32 8, %s32
          %p476 = scmp.lt.s32.totalorder %s475, 7
          %s477 = scalar_select %p476, %s475, 7
          %s478 = smul.addr %s477, 8
          %s479 = scalar_lea.vmem %s0, %s478
          %s480 = smul.u32 8, %s32
        $region16: #{vit_super_forward.3} parent=11 // pred_fallthru
          _
        // Predicated region
        $region17: #{vit_super_forward.3} parent=11 // pred_check
          %p481 = pneg %p368
        $region18: #{vit_super_forward.3} parent=11 // pred_check_branch
          %483 = sbr.rel (%p481) target = $region20
        $region19: #{vit_super_forward.3} parent=11 // pred_region
          _
        $region20: #{vit_super_forward.3} parent=11 // pred_fallthru
          _
        // Predicated region
        $region21: #{vit_super_forward.3} parent=11 // pred_check
          %p484 = pneg %p389
        $region22: #{vit_super_forward.3} parent=11 // pred_check_branch
          %486 = sbr.rel (%p484) target = $region24
        $region23: #{vit_super_forward.3} parent=11 // pred_region
          _
        $region24: #{vit_super_forward.3} parent=11 // pred_fallthru
          _
        // Predicated region
        $region25: #{vit_super_forward.3} parent=11 // pred_check
          %p487 = pneg %p410
        $region26: #{vit_super_forward.3} parent=11 // pred_check_branch
          %489 = sbr.rel (%p487) target = $region28
        $region27: #{vit_super_forward.3} parent=11 // pred_region
          _
        $region28: #{vit_super_forward.3} parent=11 // pred_fallthru
          _
        // Predicated region
        $region29: #{vit_super_forward.3} parent=11 // pred_check
          %p490 = pneg %p431
        $region30: #{vit_super_forward.3} parent=11 // pred_check_branch
          %492 = sbr.rel (%p490) target = $region32
        $region31: #{vit_super_forward.3} parent=11 // pred_region
          _
        $region32: #{vit_super_forward.3} parent=11 // pred_fallthru
          _
      $region12: #{vit_super_forward.3} parent=5 // pred_fallthru
        _
      %p493 = scmp.lt.s32.totalorder %s23, 2
      // Predicated region
      $region33: #{vit_super_forward.3} parent=5 // pred_check
        %p494 = pneg %p493
      $region34: #{vit_super_forward.3} parent=5 // pred_check_branch
        %496 = sbr.rel (%p494) target = $region36
      $region35: #{vit_super_forward.3} parent=5 // pred_region
        // Predicated region
        $region37: #{vit_super_forward.3} parent=35 // pred_check
          %p497 = pneg %p81
        $region38: #{vit_super_forward.3} parent=35 // pred_check_branch
          %499 = sbr.rel (%p497) target = $region40
        $region39: #{vit_super_forward.3} parent=35 // pred_region
          %p500 = scmp.lt.s32.totalorder %s31, 1
          %s501 = scalar_select %p500, %s31, 1
          %s502 = scalar_lea.vmem %s1, %s501
        $region40: #{vit_super_forward.3} parent=35 // pred_fallthru
          _
        // Predicated region
        $region41: #{vit_super_forward.3} parent=35 // pred_check
          %p503 = pneg %p107
        $region42: #{vit_super_forward.3} parent=35 // pred_check_branch
          %505 = sbr.rel (%p503) target = $region44
        $region43: #{vit_super_forward.3} parent=35 // pred_region
          %p506 = scmp.lt.s32.totalorder %s31, 1
          %s507 = scalar_select %p506, %s31, 1
          %s508 = scalar_lea.vmem %s2, %s507
        $region44: #{vit_super_forward.3} parent=35 // pred_fallthru
          _
        // Predicated region
        $region45: #{vit_super_forward.3} parent=35 // pred_check
          %p509 = pneg %p133
        $region46: #{vit_super_forward.3} parent=35 // pred_check_branch
          %511 = sbr.rel (%p509) target = $region48
        $region47: #{vit_super_forward.3} parent=35 // pred_region
          %p512 = scmp.lt.s32.totalorder %s31, 1
          %s513 = scalar_select %p512, %s31, 1
          %s514 = smul.addr %s513, 4
          %s515 = smul.addr %s514, 4
          %s516 = scalar_lea.vmem %s3, %s515
        $region48: #{vit_super_forward.3} parent=35 // pred_fallthru
          _
        // Predicated region
        $region49: #{vit_super_forward.3} parent=35 // pred_check
          %p517 = pneg %p159
        $region50: #{vit_super_forward.3} parent=35 // pred_check_branch
          %519 = sbr.rel (%p517) target = $region52
        $region51: #{vit_super_forward.3} parent=35 // pred_region
          %p520 = scmp.lt.s32.totalorder %s31, 1
          %s521 = scalar_select %p520, %s31, 1
          %s522 = smul.addr %s521, 4
          %s523 = smul.addr %s522, 4
          %s524 = scalar_lea.vmem %s4, %s523
        $region52: #{vit_super_forward.3} parent=35 // pred_fallthru
          _
        // Predicated region
        $region53: #{vit_super_forward.3} parent=35 // pred_check
          %p525 = pneg %p185
        $region54: #{vit_super_forward.3} parent=35 // pred_check_branch
          %527 = sbr.rel (%p525) target = $region56
        $region55: #{vit_super_forward.3} parent=35 // pred_region
          %p528 = scmp.lt.s32.totalorder %s31, 1
          %s529 = scalar_select %p528, %s31, 1
          %s530 = scalar_lea.vmem %s5, %s529
        $region56: #{vit_super_forward.3} parent=35 // pred_fallthru
          _
        // Predicated region
        $region57: #{vit_super_forward.3} parent=35 // pred_check
          %p531 = pneg %p211
        $region58: #{vit_super_forward.3} parent=35 // pred_check_branch
          %533 = sbr.rel (%p531) target = $region60
        $region59: #{vit_super_forward.3} parent=35 // pred_region
          %p534 = scmp.lt.s32.totalorder %s31, 1
          %s535 = scalar_select %p534, %s31, 1
          %s536 = scalar_lea.vmem %s6, %s535
        $region60: #{vit_super_forward.3} parent=35 // pred_fallthru
          _
        // Predicated region
        $region61: #{vit_super_forward.3} parent=35 // pred_check
          %p537 = pneg %p237
        $region62: #{vit_super_forward.3} parent=35 // pred_check_branch
          %539 = sbr.rel (%p537) target = $region64
        $region63: #{vit_super_forward.3} parent=35 // pred_region
          %p540 = scmp.lt.s32.totalorder %s31, 1
          %s541 = scalar_select %p540, %s31, 1
          %s542 = scalar_lea.vmem %s7, %s541
        $region64: #{vit_super_forward.3} parent=35 // pred_fallthru
          _
        // Predicated region
        $region65: #{vit_super_forward.3} parent=35 // pred_check
          %p543 = pneg %p263
        $region66: #{vit_super_forward.3} parent=35 // pred_check_branch
          %545 = sbr.rel (%p543) target = $region68
        $region67: #{vit_super_forward.3} parent=35 // pred_region
          %p546 = scmp.lt.s32.totalorder %s31, 1
          %s547 = scalar_select %p546, %s31, 1
          %s548 = smul.addr %s547, 4
          %s549 = smul.addr %s548, 4
          %s550 = scalar_lea.vmem %s8, %s549
        $region68: #{vit_super_forward.3} parent=35 // pred_fallthru
          _
        // Predicated region
        $region69: #{vit_super_forward.3} parent=35 // pred_check
          %p551 = pneg %p289
        $region70: #{vit_super_forward.3} parent=35 // pred_check_branch
          %553 = sbr.rel (%p551) target = $region72
        $region71: #{vit_super_forward.3} parent=35 // pred_region
          %p554 = scmp.lt.s32.totalorder %s31, 1
          %s555 = scalar_select %p554, %s31, 1
          %s556 = scalar_lea.vmem %s9, %s555
        $region72: #{vit_super_forward.3} parent=35 // pred_fallthru
          _
        // Predicated region
        $region73: #{vit_super_forward.3} parent=35 // pred_check
          %p557 = pneg %p315
        $region74: #{vit_super_forward.3} parent=35 // pred_check_branch
          %559 = sbr.rel (%p557) target = $region76
        $region75: #{vit_super_forward.3} parent=35 // pred_region
          %p560 = scmp.lt.s32.totalorder %s31, 1
          %s561 = scalar_select %p560, %s31, 1
          %s562 = smul.addr %s561, 16
          %s563 = smul.addr %s562, 4
          %s564 = scalar_lea.vmem %s10, %s563
        $region76: #{vit_super_forward.3} parent=35 // pred_fallthru
          _
        // Predicated region
        $region77: #{vit_super_forward.3} parent=35 // pred_check
          %p565 = pneg %p341
        $region78: #{vit_super_forward.3} parent=35 // pred_check_branch
          %567 = sbr.rel (%p565) target = $region80
        $region79: #{vit_super_forward.3} parent=35 // pred_region
          %p568 = scmp.lt.s32.totalorder %s31, 1
          %s569 = scalar_select %p568, %s31, 1
          %s570 = scalar_lea.vmem %s11, %s569
        $region80: #{vit_super_forward.3} parent=35 // pred_fallthru
          _
      $region36: #{vit_super_forward.3} parent=5 // pred_fallthru
        _
      %p571 = scmp.le.s32.totalorder 1, %s23
      %p572 = scmp.lt.s32.totalorder %s23, 3
      %p573 = pnand %p571, %p572
      %p574 = pneg %p573
      // Predicated region
      $region81: #{vit_super_forward.3} parent=5 // pred_check
        _
      $region82: #{vit_super_forward.3} parent=5 // pred_check_branch
        %576 = sbr.rel (%p573) target = $region84
      $region83: #{vit_super_forward.3} parent=5 // pred_region
        %s577 = ssub.s32 %s23, 1
        %s578 = smul.u32 8, %s32
        %p579 = scmp.lt.s32.totalorder %s578, 7
        %s580 = scalar_select %p579, %s578, 7
        %s581 = smul.addr %s580, 8
        %s582 = scalar_lea.vmem %s0, %s581
        %p583 = pneg %p61
        %p584 = pneg %p58
        %p585 = scmp.lt.s32.totalorder %s33, 1
        %s586 = scalar_select %p585, %s33, 1
        %s587 = scalar_lea.vmem %s1, %s586
        %p588 = pneg %p87
        %p589 = pneg %p84
        %p590 = scmp.lt.s32.totalorder %s33, 1
        %s591 = scalar_select %p590, %s33, 1
        %s592 = scalar_lea.vmem %s2, %s591
        %p593 = pneg %p113
        %p594 = pneg %p110
        %p595 = scmp.lt.s32.totalorder %s33, 1
        %s596 = scalar_select %p595, %s33, 1
        %s597 = smul.addr %s596, 4
        %s598 = smul.addr %s597, 4
        %s599 = scalar_lea.vmem %s3, %s598
        %p600 = pneg %p139
        %p601 = pneg %p136
        %p602 = scmp.lt.s32.totalorder %s33, 1
        %s603 = scalar_select %p602, %s33, 1
        %s604 = smul.addr %s603, 4
        %s605 = smul.addr %s604, 4
        %s606 = scalar_lea.vmem %s4, %s605
        %p607 = pneg %p165
        %p608 = pneg %p162
        %p609 = scmp.lt.s32.totalorder %s33, 1
        %s610 = scalar_select %p609, %s33, 1
        %s611 = scalar_lea.vmem %s5, %s610
        %p612 = pneg %p191
        %p613 = pneg %p188
        %p614 = scmp.lt.s32.totalorder %s33, 1
        %s615 = scalar_select %p614, %s33, 1
        %s616 = scalar_lea.vmem %s6, %s615
        %p617 = pneg %p217
        %p618 = pneg %p214
        %p619 = scmp.lt.s32.totalorder %s33, 1
        %s620 = scalar_select %p619, %s33, 1
        %s621 = scalar_lea.vmem %s7, %s620
        %p622 = pneg %p243
        %p623 = pneg %p240
        %p624 = scmp.lt.s32.totalorder %s33, 1
        %s625 = scalar_select %p624, %s33, 1
        %s626 = smul.addr %s625, 4
        %s627 = smul.addr %s626, 4
        %s628 = scalar_lea.vmem %s8, %s627
        %p629 = pneg %p269
        %p630 = pneg %p266
        %p631 = scmp.lt.s32.totalorder %s33, 1
        %s632 = scalar_select %p631, %s33, 1
        %s633 = scalar_lea.vmem %s9, %s632
        %p634 = pneg %p295
        %p635 = pneg %p292
        %p636 = scmp.lt.s32.totalorder %s33, 1
        %s637 = scalar_select %p636, %s33, 1
        %s638 = smul.addr %s637, 16
        %s639 = smul.addr %s638, 4
        %s640 = scalar_lea.vmem %s10, %s639
        %p641 = pneg %p321
        %p642 = pneg %p318
        %p643 = scmp.lt.s32.totalorder %s33, 1
        %s644 = scalar_select %p643, %s33, 1
        %s645 = scalar_lea.vmem %s11, %s644
        %p646 = pneg %p347
        %p647 = pneg %p344
        %p648 = pneg %p368
        %p649 = pneg %p365
        %p650 = pneg %p389
        %p651 = pneg %p386
        %p652 = pneg %p410
        %p653 = pneg %p407
        %p654 = pneg %p431
        %p655 = pneg %p428
        %p656 = pneg %p457
        %p657 = pneg %p454
        %s658 = smul.u32 8, %s32
        %p659 = scmp.lt.s32.totalorder %s658, 7
        %s660 = scalar_select %p659, %s658, 7
        %s661 = smul.addr %s660, 8
        %s662 = scalar_lea.vmem %s0, %s661
        %s663 = smul.u32 8, %s32
        %p664 = scmp.lt.s32.totalorder %s33, 1
        %s665 = scalar_select %p664, %s33, 1
        %s666 = scalar_lea.vmem %s1, %s665
        %p667 = scmp.lt.s32.totalorder %s33, 1
        %s668 = scalar_select %p667, %s33, 1
        %s669 = scalar_lea.vmem %s2, %s668
        %p670 = scmp.lt.s32.totalorder %s33, 1
        %s671 = scalar_select %p670, %s33, 1
        %s672 = smul.addr %s671, 4
        %s673 = smul.addr %s672, 4
        %s674 = scalar_lea.vmem %s3, %s673
        %p675 = scmp.lt.s32.totalorder %s33, 1
        %s676 = scalar_select %p675, %s33, 1
        %s677 = smul.addr %s676, 4
        %s678 = smul.addr %s677, 4
        %s679 = scalar_lea.vmem %s4, %s678
        %p680 = scmp.lt.s32.totalorder %s33, 1
        %s681 = scalar_select %p680, %s33, 1
        %s682 = scalar_lea.vmem %s5, %s681
        %p683 = scmp.lt.s32.totalorder %s33, 1
        %s684 = scalar_select %p683, %s33, 1
        %s685 = scalar_lea.vmem %s6, %s684
        %p686 = scmp.lt.s32.totalorder %s33, 1
        %s687 = scalar_select %p686, %s33, 1
        %s688 = scalar_lea.vmem %s7, %s687
        %p689 = scmp.lt.s32.totalorder %s33, 1
        %s690 = scalar_select %p689, %s33, 1
        %s691 = smul.addr %s690, 4
        %s692 = smul.addr %s691, 4
        %s693 = scalar_lea.vmem %s8, %s692
        %p694 = scmp.lt.s32.totalorder %s33, 1
        %s695 = scalar_select %p694, %s33, 1
        %s696 = scalar_lea.vmem %s9, %s695
        %p697 = scmp.lt.s32.totalorder %s33, 1
        %s698 = scalar_select %p697, %s33, 1
        %s699 = smul.addr %s698, 16
        %s700 = smul.addr %s699, 4
        %s701 = scalar_lea.vmem %s10, %s700
        %p702 = scmp.lt.s32.totalorder %s33, 1
        %s703 = scalar_select %p702, %s33, 1
        %s704 = scalar_lea.vmem %s11, %s703
        %p706 = scmp.eq.s32.totalorder %s33, 0
        // Predicated region
        $region85: #{vit_super_forward.3} parent=83 // pred_check
          %p707 = pneg %p706
        $region86: #{vit_super_forward.3} parent=83 // pred_check_branch
          %709 = sbr.rel (%p707) target = $region88
        $region87: #{vit_super_forward.3} parent=83 // pred_region
          %v710 = vld [vmem:[%s662] sm:$0xff]
          %v711 = vld [vmem:[%s662 + $0x8] sm:$0xff]
          %v712 = vld [vmem:[%s662 + $0x10] sm:$0xff]
          %v713 = vld [vmem:[%s662 + $0x18] sm:$0xff]
          %v714 = vld [vmem:[%s662 + $0x20] sm:$0xff]
          %v715 = vld [vmem:[%s662 + $0x28] sm:$0xff]
          %v716 = vld [vmem:[%s662 + $0x30] sm:$0xff]
          %v717 = vld [vmem:[%s662 + $0x38] sm:$0xff]
          %vm718 = vcmask 261120
          %719 = vst.msk [vmem:[#allocation2] sm:$0xff] %vm718, %v710
          %720 = vst.msk [vmem:[#allocation2 + $0x8] sm:$0xff] %vm718, %v711
          %721 = vst.msk [vmem:[#allocation2 + $0x10] sm:$0xff] %vm718, %v712
          %722 = vst.msk [vmem:[#allocation2 + $0x18] sm:$0xff] %vm718, %v713
          %723 = vst.msk [vmem:[#allocation2 + $0x20] sm:$0xff] %vm718, %v714
          %724 = vst.msk [vmem:[#allocation2 + $0x28] sm:$0xff] %vm718, %v715
          %725 = vst.msk [vmem:[#allocation2 + $0x30] sm:$0xff] %vm718, %v716
          %726 = vst.msk [vmem:[#allocation2 + $0x38] sm:$0xff] %vm718, %v717
        $region88: #{vit_super_forward.3} parent=83 // pred_fallthru
          _
        %v727 = vld [vmem:[#allocation2] sm:$0xff]
        %v728 = vld [vmem:[#allocation2 + $0x8] sm:$0xff]
        %v729 = vld [vmem:[#allocation2 + $0x10] sm:$0xff]
        %v730 = vld [vmem:[#allocation2 + $0x18] sm:$0xff]
        %v731 = vld [vmem:[#allocation2 + $0x20] sm:$0xff]
        %v732 = vld [vmem:[#allocation2 + $0x28] sm:$0xff]
        %v733 = vld [vmem:[#allocation2 + $0x30] sm:$0xff]
        %v734 = vld [vmem:[#allocation2 + $0x38] sm:$0xff]
        %v735 = vld [vmem:[%s666] sm:$0x1]
        %v736 = vld [vmem:[%s669] sm:$0x1]
        %vm737 = vcmask 261120
        %v738 = vsel %vm737, %v727, 0.0
        %739 = vadd.xlane.f32.xlu0 %v738
        %v740 = vpop.xlane.xlu0 %739
        %v741 = vsel %vm737, %v728, 0.0
        %742 = vadd.xlane.f32.xlu0 %v741
        %v743 = vpop.xlane.xlu0 %742
        %v744 = vsel %vm737, %v729, 0.0
        %745 = vadd.xlane.f32.xlu0 %v744
        %v746 = vpop.xlane.xlu0 %745
        %v747 = vsel %vm737, %v730, 0.0
        %748 = vadd.xlane.f32.xlu0 %v747
        %v749 = vpop.xlane.xlu0 %748
        %v750 = vsel %vm737, %v731, 0.0
        %751 = vadd.xlane.f32.xlu0 %v750
        %v752 = vpop.xlane.xlu0 %751
        %v753 = vsel %vm737, %v732, 0.0
        %754 = vadd.xlane.f32.xlu0 %v753
        %v755 = vpop.xlane.xlu0 %754
        %v756 = vsel %vm737, %v733, 0.0
        %757 = vadd.xlane.f32.xlu0 %v756
        %v758 = vpop.xlane.xlu0 %757
        %v759 = vsel %vm737, %v734, 0.0
        %760 = vadd.xlane.f32.xlu0 %v759
        %v761 = vpop.xlane.xlu0 %760
        %v762 = vrcp.pop 32.0
        %v763 = vmul.f32 32.0, %v762
        %v764 = vsub.f32 1.0, %v763
        %v765 = vmul.f32 %v762, %v764
        %v766 = vadd.f32 %v762, %v765
        %vm767 = vweird.f32 %v762
        %v768 = vsel %vm767, %v762, %v766
        %v769 = vmul.f32 %v740, %v768
        %v770 = vmul.f32 %v743, %v768
        %v771 = vmul.f32 %v746, %v768
        %v772 = vmul.f32 %v749, %v768
        %v773 = vmul.f32 %v752, %v768
        %v774 = vmul.f32 %v755, %v768
        %v775 = vmul.f32 %v758, %v768
        %v776 = vmul.f32 %v761, %v768
        %v777 = vsub.f32 %v727, %v769
        %v778 = vsub.f32 %v728, %v770
        %v779 = vsub.f32 %v729, %v771
        %v780 = vsub.f32 %v730, %v772
        %v781 = vsub.f32 %v731, %v773
        %v782 = vsub.f32 %v732, %v774
        %v783 = vsub.f32 %v733, %v775
        %v784 = vsub.f32 %v734, %v776
        %v785 = vmul.f32 %v777, %v777
        %v786 = vmul.f32 %v778, %v778
        %v787 = vmul.f32 %v779, %v779
        %v788 = vmul.f32 %v780, %v780
        %v789 = vmul.f32 %v781, %v781
        %v790 = vmul.f32 %v782, %v782
        %v791 = vmul.f32 %v783, %v783
        %v792 = vmul.f32 %v784, %v784
        %v793 = vsel %vm737, %v785, 0.0
        %794 = vadd.xlane.f32.xlu0 %v793
        %v795 = vpop.xlane.xlu0 %794
        %v796 = vsel %vm737, %v786, 0.0
        %797 = vadd.xlane.f32.xlu0 %v796
        %v798 = vpop.xlane.xlu0 %797
        %v799 = vsel %vm737, %v787, 0.0
        %800 = vadd.xlane.f32.xlu0 %v799
        %v801 = vpop.xlane.xlu0 %800
        %v802 = vsel %vm737, %v788, 0.0
        %803 = vadd.xlane.f32.xlu0 %v802
        %v804 = vpop.xlane.xlu0 %803
        %v805 = vsel %vm737, %v789, 0.0
        %806 = vadd.xlane.f32.xlu0 %v805
        %v807 = vpop.xlane.xlu0 %806
        %v808 = vsel %vm737, %v790, 0.0
        %809 = vadd.xlane.f32.xlu0 %v808
        %v810 = vpop.xlane.xlu0 %809
        %v811 = vsel %vm737, %v791, 0.0
        %812 = vadd.xlane.f32.xlu0 %v811
        %v813 = vpop.xlane.xlu0 %812
        %v814 = vsel %vm737, %v792, 0.0
        %815 = vadd.xlane.f32.xlu0 %v814
        %v816 = vpop.xlane.xlu0 %815
        %v817 = vmul.f32 %v795, %v768
        %v818 = vmul.f32 %v798, %v768
        %v819 = vmul.f32 %v801, %v768
        %v820 = vmul.f32 %v804, %v768
        %v821 = vmul.f32 %v807, %v768
        %v822 = vmul.f32 %v810, %v768
        %v823 = vmul.f32 %v813, %v768
        %v824 = vmul.f32 %v816, %v768
        %v825 = vadd.f32 %v817, 1e-05
        %v826 = vadd.f32 %v818, 1e-05
        %v827 = vadd.f32 %v819, 1e-05
        %v828 = vadd.f32 %v820, 1e-05
        %v829 = vadd.f32 %v821, 1e-05
        %v830 = vadd.f32 %v822, 1e-05
        %v831 = vadd.f32 %v823, 1e-05
        %v832 = vadd.f32 %v824, 1e-05
        %v833 = vrsqrt.pop %v825
        %v834 = vmul.f32 %v833, %v825
        %v835 = vmul.f32 %v834, %v833
        %v836 = vmul.f32 0.5, %v835
        %v837 = vsub.f32 1.5, %v836
        %v838 = vmul.f32 %v833, %v837
        %vm839 = vweird.f32 %v825
        %vm840 = vweird.f32 %v833
        %vm841 = vmor %vm839, %vm840
        %v842 = vsel %vm841, %v833, %v838
        %v843 = vrsqrt.pop %v826
        %v844 = vmul.f32 %v843, %v826
        %v845 = vmul.f32 %v844, %v843
        %v846 = vmul.f32 0.5, %v845
        %v847 = vsub.f32 1.5, %v846
        %v848 = vmul.f32 %v843, %v847
        %vm849 = vweird.f32 %v826
        %vm850 = vweird.f32 %v843
        %vm851 = vmor %vm849, %vm850
        %v852 = vsel %vm851, %v843, %v848
        %v853 = vrsqrt.pop %v827
        %v854 = vmul.f32 %v853, %v827
        %v855 = vmul.f32 %v854, %v853
        %v856 = vmul.f32 0.5, %v855
        %v857 = vsub.f32 1.5, %v856
        %v858 = vmul.f32 %v853, %v857
        %vm859 = vweird.f32 %v827
        %vm860 = vweird.f32 %v853
        %vm861 = vmor %vm859, %vm860
        %v862 = vsel %vm861, %v853, %v858
        %v863 = vrsqrt.pop %v828
        %v864 = vmul.f32 %v863, %v828
        %v865 = vmul.f32 %v864, %v863
        %v866 = vmul.f32 0.5, %v865
        %v867 = vsub.f32 1.5, %v866
        %v868 = vmul.f32 %v863, %v867
        %vm869 = vweird.f32 %v828
        %vm870 = vweird.f32 %v863
        %vm871 = vmor %vm869, %vm870
        %v872 = vsel %vm871, %v863, %v868
        %v873 = vrsqrt.pop %v829
        %v874 = vmul.f32 %v873, %v829
        %v875 = vmul.f32 %v874, %v873
        %v876 = vmul.f32 0.5, %v875
        %v877 = vsub.f32 1.5, %v876
        %v878 = vmul.f32 %v873, %v877
        %vm879 = vweird.f32 %v829
        %vm880 = vweird.f32 %v873
        %vm881 = vmor %vm879, %vm880
        %v882 = vsel %vm881, %v873, %v878
        %v883 = vrsqrt.pop %v830
        %v884 = vmul.f32 %v883, %v830
        %v885 = vmul.f32 %v884, %v883
        %v886 = vmul.f32 0.5, %v885
        %v887 = vsub.f32 1.5, %v886
        %v888 = vmul.f32 %v883, %v887
        %vm889 = vweird.f32 %v830
        %vm890 = vweird.f32 %v883
        %vm891 = vmor %vm889, %vm890
        %v892 = vsel %vm891, %v883, %v888
        %v893 = vrsqrt.pop %v831
        %v894 = vmul.f32 %v893, %v831
        %v895 = vmul.f32 %v894, %v893
        %v896 = vmul.f32 0.5, %v895
        %v897 = vsub.f32 1.5, %v896
        %v898 = vmul.f32 %v893, %v897
        %vm899 = vweird.f32 %v831
        %vm900 = vweird.f32 %v893
        %vm901 = vmor %vm899, %vm900
        %v902 = vsel %vm901, %v893, %v898
        %v903 = vrsqrt.pop %v832
        %v904 = vmul.f32 %v903, %v832
        %v905 = vmul.f32 %v904, %v903
        %v906 = vmul.f32 0.5, %v905
        %v907 = vsub.f32 1.5, %v906
        %v908 = vmul.f32 %v903, %v907
        %vm909 = vweird.f32 %v832
        %vm910 = vweird.f32 %v903
        %vm911 = vmor %vm909, %vm910
        %v912 = vsel %vm911, %v903, %v908
        %v913 = vmul.f32 %v777, %v842
        %v914 = vmul.f32 %v778, %v852
        %v915 = vmul.f32 %v779, %v862
        %v916 = vmul.f32 %v780, %v872
        %v917 = vmul.f32 %v781, %v882
        %v918 = vmul.f32 %v782, %v892
        %v919 = vmul.f32 %v783, %v902
        %v920 = vmul.f32 %v784, %v912
        %v922 = vperm.slane %v735, 0
        %v924 = vmul.f32 %v913, %v922
        %v925 = vmul.f32 %v914, %v922
        %v926 = vmul.f32 %v915, %v922
        %v927 = vmul.f32 %v916, %v922
        %v928 = vmul.f32 %v917, %v922
        %v929 = vmul.f32 %v918, %v922
        %v930 = vmul.f32 %v919, %v922
        %v931 = vmul.f32 %v920, %v922
        %v933 = vperm.slane %v736, 0
        %v935 = vadd.f32 %v924, %v933
        %v936 = vadd.f32 %v925, %v933
        %v937 = vadd.f32 %v926, %v933
        %v938 = vadd.f32 %v927, %v933
        %v939 = vadd.f32 %v928, %v933
        %v940 = vadd.f32 %v929, %v933
        %v941 = vadd.f32 %v930, %v933
        %v942 = vadd.f32 %v931, %v933
        %v943 = vpack.c.bf16 %v936, %v935
        %v944 = vpack.c.bf16 %v938, %v937
        %v945 = vpack.c.bf16 %v940, %v939
        %v946 = vpack.c.bf16 %v942, %v941
        %v947 = vld [vmem:[%s674] sm:$0xf]
        %v948 = vld [vmem:[%s674 + $0x4] sm:$0xf]
        %v949 = vld [vmem:[%s674 + $0x8] sm:$0xf]
        %v950 = vld [vmem:[%s674 + $0xc] sm:$0xf]
        %v955 = vunpack.c.l.b16 %v947
        %v956 = vunpack.c.l.b16 %v948
        %v957 = vunpack.c.l.b16 %v949
        %v958 = vunpack.c.l.b16 %v950
        %v959 = vpack.c.b16 %v956, %v955
        %v960 = vpack.c.b16 %v958, %v957
        %v964 = vsel %vm737, %v943, 0
        %v967 = vsel %vm737, %v944, 0
        %v970 = vsel %vm737, %v945, 0
        %v973 = vsel %vm737, %v946, 0
        %975 = vmatpush.bf16.msra.mxu0 0
        %976 = vmatpush.bf16.msra.mxu0 0
        %977 = vmatpush.bf16.msra.mxu0 0
        %978 = vmatpush.bf16.msra.mxu0 0
        %979 = vmatpush.bf16.msra.mxu0 0
        %980 = vmatpush.bf16.msra.mxu0 0
        %981 = vmatpush.bf16.msra.mxu0 %v960
        %982 = vmatpush.bf16.msra.mxu0 %v959
        %983 = vmatmul.bf16.gmra.mxu0 %v964
        %v984 = vpop.f32.mrf.mxu0
        %v985 = vadd.f32 0.0, %v984
        %v986 = vpop.f32.mrf.mxu0
        %v987 = vadd.f32 0.0, %v986
        %988 = vmatmul.bf16.gmra.mxu0 %v967
        %v989 = vpop.f32.mrf.mxu0
        %v990 = vadd.f32 0.0, %v989
        %v991 = vpop.f32.mrf.mxu0
        %v992 = vadd.f32 0.0, %v991
        %993 = vmatmul.bf16.gmra.mxu0 %v970
        %v994 = vpop.f32.mrf.mxu0
        %v995 = vadd.f32 0.0, %v994
        %v996 = vpop.f32.mrf.mxu0
        %v997 = vadd.f32 0.0, %v996
        %998 = vmatmul.bf16.gmra.mxu0 %v973
        %v999 = vpop.f32.mrf.mxu0
        %v1000 = vadd.f32 0.0, %v999
        %v1001 = vpop.f32.mrf.mxu0
        %v1002 = vadd.f32 0.0, %v1001
        %1003 = vdwg.mxu0
        %v1004 = vpack.c.bf16 %v985, %v985
        %v1005 = vpack.c.bf16 %v987, %v987
        %v1006 = vpack.c.bf16 %v990, %v990
        %v1007 = vpack.c.bf16 %v992, %v992
        %v1008 = vpack.c.bf16 %v995, %v995
        %v1009 = vpack.c.bf16 %v997, %v997
        %v1010 = vpack.c.bf16 %v1000, %v1000
        %v1011 = vpack.c.bf16 %v1002, %v1002
        %vm1012 = vcmask 781312
        %1013 = vst.msk [vmem:[#allocation3] sm:$0xf] %vm1012, %v1004
        %1014 = vst.msk [vmem:[#allocation3 + $0x4] sm:$0xf] %vm1012, %v1005
        %1015 = vst.msk [vmem:[#allocation3 + $0x8] sm:$0xf] %vm1012, %v1006
        %1016 = vst.msk [vmem:[#allocation3 + $0xc] sm:$0xf] %vm1012, %v1007
        %1017 = vst.msk [vmem:[#allocation3 + $0x10] sm:$0xf] %vm1012, %v1008
        %1018 = vst.msk [vmem:[#allocation3 + $0x14] sm:$0xf] %vm1012, %v1009
        %1019 = vst.msk [vmem:[#allocation3 + $0x18] sm:$0xf] %vm1012, %v1010
        %1020 = vst.msk [vmem:[#allocation3 + $0x1c] sm:$0xf] %vm1012, %v1011
        %v1021 = vlaneseq
        %v1022 = vand.u32 %v1021, 127
        %vm1023 = vcmp.lt.s32.totalorder %v1022, 17
        %v1024 = vsel %vm1023, 0.0, -1e+30
        loop: start=0, step=1, limit=2
        $region89: #{vit_super_forward.3} parent=83 // loop_pre_header
          _
        $region90: #{vit_super_forward.3} parent=83 // loop_header
          %s1026 = sphi 0, %s1030
          %p1027 = scmp.ge.s32.totalorder %s1026, 2
        $region91: #{vit_super_forward.3} parent=83 // loop_header_branch
          %1029 = sbr.rel (%p1027) target = $region95
        $region92: #{vit_super_forward.3} parent=83 // loop_body
          %s1031 = smul.u32 %s1026, 32
          %s1032 = sshra.s32 %s1031, 3
          %s1033 = sand.u32 %s1031, 7
          %s1034 = smul.addr %s1032, 4
          %s1035 = scalar_lea.vmem [#allocation3], %s1034
          %v1036 = vld [vmem:[%s1035] sm:$0xf]
          %v1037 = vld [vmem:[%s1035 + $0x4] sm:$0xf]
          %v1038 = vld [vmem:[%s1035 + $0x8] sm:$0xf]
          %v1039 = vld [vmem:[%s1035 + $0xc] sm:$0xf]
          %v1044 = vunpack.c.l.b16 %v1036
          %v1045 = vunpack.c.l.b16 %v1037
          %v1046 = vunpack.c.l.b16 %v1038
          %v1047 = vunpack.c.l.b16 %v1039
          %v1048 = vpack.c.b16 %v1045, %v1044
          %v1049 = vpack.c.b16 %v1047, %v1046
          %1050 = vrot.lane.b32.xlu0 %v1048, 96
          %v1051 = vpop.permute.xlu0 %1050
          %1052 = vrot.lane.b32.xlu0 %v1049, 96
          %v1053 = vpop.permute.xlu0 %1052
          %vm1054 = vcmask 64512
          %v1056 = vsel %vm1054, %v1048, 0
          %v1059 = vsel %vm1054, %v1049, 0
          %v1062 = vsel %vm1054, %v1051, 0
          %v1065 = vsel %vm1054, %v1053, 0
          %1067 = vmatpush.bf16.xpose.msra.mxu0 0
          %1068 = vmatpush.bf16.xpose.msra.mxu0 0
          %1069 = vmatpush.bf16.xpose.msra.mxu0 0
          %1070 = vmatpush.bf16.xpose.msra.mxu0 0
          %1071 = vmatpush.bf16.xpose.msra.mxu0 0
          %1072 = vmatpush.bf16.xpose.msra.mxu0 0
          %1073 = vmatpush.bf16.xpose.msra.mxu0 %v1065
          %1074 = vmatpush.bf16.xpose.msra.mxu0 %v1062
          %1075 = vmatmul.bf16.gmra.mxu0 %v1056
          %v1076 = vpop.f32.mrf.mxu0
          %v1077 = vadd.f32 %v1024, %v1076
          %v1078 = vpop.f32.mrf.mxu0
          %v1079 = vadd.f32 %v1024, %v1078
          %1080 = vmatmul.bf16.gmra.mxu0 %v1059
          %v1081 = vpop.f32.mrf.mxu0
          %v1082 = vadd.f32 %v1024, %v1081
          %v1083 = vpop.f32.mrf.mxu0
          %v1084 = vadd.f32 %v1024, %v1083
          %1085 = vdwg.mxu0
          %v1086 = vsel %vm737, %v1077, -inf
          %1087 = vmax.xlane.f32.xlu0 %v1086
          %v1088 = vpop.xlane.xlu0 %1087
          %v1089 = vsel %vm737, %v1079, -inf
          %1090 = vmax.xlane.f32.xlu0 %v1089
          %v1091 = vpop.xlane.xlu0 %1090
          %v1092 = vsel %vm737, %v1082, -inf
          %1093 = vmax.xlane.f32.xlu0 %v1092
          %v1094 = vpop.xlane.xlu0 %1093
          %v1095 = vsel %vm737, %v1084, -inf
          %1096 = vmax.xlane.f32.xlu0 %v1095
          %v1097 = vpop.xlane.xlu0 %1096
          %v1098 = vsub.f32 %v1077, %v1088
          %v1099 = vsub.f32 %v1079, %v1091
          %v1100 = vsub.f32 %v1082, %v1094
          %v1101 = vsub.f32 %v1084, %v1097
          %v1102 = vmul.f32 %v1098, 1.442695
          %v1103 = vpow.pop %v1102
          %v1104 = vmul.f32 %v1099, 1.442695
          %v1105 = vpow.pop %v1104
          %v1106 = vmul.f32 %v1100, 1.442695
          %v1107 = vpow.pop %v1106
          %v1108 = vmul.f32 %v1101, 1.442695
          %v1109 = vpow.pop %v1108
          %v1110 = vsel %vm737, %v1103, 0.0
          %1111 = vadd.xlane.f32.xlu0 %v1110
          %v1112 = vpop.xlane.xlu0 %1111
          %v1113 = vsel %vm737, %v1105, 0.0
          %1114 = vadd.xlane.f32.xlu0 %v1113
          %v1115 = vpop.xlane.xlu0 %1114
          %v1116 = vsel %vm737, %v1107, 0.0
          %1117 = vadd.xlane.f32.xlu0 %v1116
          %v1118 = vpop.xlane.xlu0 %1117
          %v1119 = vsel %vm737, %v1109, 0.0
          %1120 = vadd.xlane.f32.xlu0 %v1119
          %v1121 = vpop.xlane.xlu0 %1120
          %v1122 = vrcp.pop %v1112
          %v1123 = vrcp.pop %v1115
          %v1124 = vrcp.pop %v1118
          %v1125 = vrcp.pop %v1121
          %v1126 = vmul.f32 %v1103, %v1122
          %v1127 = vmul.f32 %v1105, %v1123
          %v1128 = vmul.f32 %v1107, %v1124
          %v1129 = vmul.f32 %v1109, %v1125
          %v1130 = vpack.c.bf16 %v1127, %v1126
          %v1131 = vpack.c.bf16 %v1129, %v1128
          %1132 = vrot.lane.b32.xlu0 %v1048, 64
          %v1133 = vpop.permute.xlu0 %1132
          %1134 = vrot.lane.b32.xlu0 %v1049, 64
          %v1135 = vpop.permute.xlu0 %1134
          %v1139 = vsel %vm737, %v1130, 0
          %v1142 = vsel %vm737, %v1131, 0
          %1144 = vmatpush.bf16.msra.mxu0 0
          %1145 = vmatpush.bf16.msra.mxu0 0
          %1146 = vmatpush.bf16.msra.mxu0 0
          %1147 = vmatpush.bf16.msra.mxu0 0
          %1148 = vmatpush.bf16.msra.mxu0 0
          %1149 = vmatpush.bf16.msra.mxu0 0
          %1150 = vmatpush.bf16.msra.mxu0 %v1135
          %1151 = vmatpush.bf16.msra.mxu0 %v1133
          %1152 = vmatmul.bf16.gmra.mxu0 %v1139
          %v1153 = vpop.f32.mrf.mxu0
          %v1154 = vadd.f32 0.0, %v1153
          %v1155 = vpop.f32.mrf.mxu0
          %v1156 = vadd.f32 0.0, %v1155
          %1157 = vmatmul.bf16.gmra.mxu0 %v1142
          %v1158 = vpop.f32.mrf.mxu0
          %v1159 = vadd.f32 0.0, %v1158
          %v1160 = vpop.f32.mrf.mxu0
          %v1161 = vadd.f32 0.0, %v1160
          %1162 = vdwg.mxu0
          %1163 = vrot.lane.b32.xlu0 %v1048, 120
          %v1164 = vpop.permute.xlu0 %1163
          %1165 = vrot.lane.b32.xlu0 %v1049, 120
          %v1166 = vpop.permute.xlu0 %1165
          %1167 = vrot.lane.b32.xlu0 %v1048, 88
          %v1168 = vpop.permute.xlu0 %1167
          %1169 = vrot.lane.b32.xlu0 %v1049, 88
          %v1170 = vpop.permute.xlu0 %1169
          %v1172 = vsel %vm1054, %v1164, 0
          %v1175 = vsel %vm1054, %v1166, 0
          %v1178 = vsel %vm1054, %v1168, 0
          %v1181 = vsel %vm1054, %v1170, 0
          %1183 = vmatpush.bf16.xpose.msra.mxu0 0
          %1184 = vmatpush.bf16.xpose.msra.mxu0 0
          %1185 = vmatpush.bf16.xpose.msra.mxu0 0
          %1186 = vmatpush.bf16.xpose.msra.mxu0 0
          %1187 = vmatpush.bf16.xpose.msra.mxu0 0
          %1188 = vmatpush.bf16.xpose.msra.mxu0 0
          %1189 = vmatpush.bf16.xpose.msra.mxu0 %v1181
          %1190 = vmatpush.bf16.xpose.msra.mxu0 %v1178
          %1191 = vmatmul.bf16.gmra.mxu0 %v1172
          %v1192 = vpop.f32.mrf.mxu0
          %v1193 = vadd.f32 %v1024, %v1192
          %v1194 = vpop.f32.mrf.mxu0
          %v1195 = vadd.f32 %v1024, %v1194
          %1196 = vmatmul.bf16.gmra.mxu0 %v1175
          %v1197 = vpop.f32.mrf.mxu0
          %v1198 = vadd.f32 %v1024, %v1197
          %v1199 = vpop.f32.mrf.mxu0
          %v1200 = vadd.f32 %v1024, %v1199
          %1201 = vdwg.mxu0
          %v1202 = vsel %vm737, %v1193, -inf
          %1203 = vmax.xlane.f32.xlu0 %v1202
          %v1204 = vpop.xlane.xlu0 %1203
          %v1205 = vsel %vm737, %v1195, -inf
          %1206 = vmax.xlane.f32.xlu0 %v1205
          %v1207 = vpop.xlane.xlu0 %1206
          %v1208 = vsel %vm737, %v1198, -inf
          %1209 = vmax.xlane.f32.xlu0 %v1208
          %v1210 = vpop.xlane.xlu0 %1209
          %v1211 = vsel %vm737, %v1200, -inf
          %1212 = vmax.xlane.f32.xlu0 %v1211
          %v1213 = vpop.xlane.xlu0 %1212
          %v1214 = vsub.f32 %v1193, %v1204
          %v1215 = vsub.f32 %v1195, %v1207
          %v1216 = vsub.f32 %v1198, %v1210
          %v1217 = vsub.f32 %v1200, %v1213
          %v1218 = vmul.f32 %v1214, 1.442695
          %v1219 = vpow.pop %v1218
          %v1220 = vmul.f32 %v1215, 1.442695
          %v1221 = vpow.pop %v1220
          %v1222 = vmul.f32 %v1216, 1.442695
          %v1223 = vpow.pop %v1222
          %v1224 = vmul.f32 %v1217, 1.442695
          %v1225 = vpow.pop %v1224
          %v1226 = vsel %vm737, %v1219, 0.0
          %1227 = vadd.xlane.f32.xlu0 %v1226
          %v1228 = vpop.xlane.xlu0 %1227
          %v1229 = vsel %vm737, %v1221, 0.0
          %1230 = vadd.xlane.f32.xlu0 %v1229
          %v1231 = vpop.xlane.xlu0 %1230
          %v1232 = vsel %vm737, %v1223, 0.0
          %1233 = vadd.xlane.f32.xlu0 %v1232
          %v1234 = vpop.xlane.xlu0 %1233
          %v1235 = vsel %vm737, %v1225, 0.0
          %1236 = vadd.xlane.f32.xlu0 %v1235
          %v1237 = vpop.xlane.xlu0 %1236
          %v1238 = vrcp.pop %v1228
          %v1239 = vrcp.pop %v1231
          %v1240 = vrcp.pop %v1234
          %v1241 = vrcp.pop %v1237
          %v1242 = vmul.f32 %v1219, %v1238
          %v1243 = vmul.f32 %v1221, %v1239
          %v1244 = vmul.f32 %v1223, %v1240
          %v1245 = vmul.f32 %v1225, %v1241
          %v1246 = vpack.c.bf16 %v1243, %v1242
          %v1247 = vpack.c.bf16 %v1245, %v1244
          %1248 = vrot.lane.b32.xlu0 %v1048, 56
          %v1249 = vpop.permute.xlu0 %1248
          %1250 = vrot.lane.b32.xlu0 %v1049, 56
          %v1251 = vpop.permute.xlu0 %1250
          %v1255 = vsel %vm737, %v1246, 0
          %v1258 = vsel %vm737, %v1247, 0
          %1260 = vmatpush.bf16.msra.mxu0 0
          %1261 = vmatpush.bf16.msra.mxu0 0
          %1262 = vmatpush.bf16.msra.mxu0 0
          %1263 = vmatpush.bf16.msra.mxu0 0
          %1264 = vmatpush.bf16.msra.mxu0 0
          %1265 = vmatpush.bf16.msra.mxu0 0
          %1266 = vmatpush.bf16.msra.mxu0 %v1251
          %1267 = vmatpush.bf16.msra.mxu0 %v1249
          %1268 = vmatmul.bf16.gmra.mxu0 %v1255
          %v1269 = vpop.f32.mrf.mxu0
          %v1270 = vadd.f32 0.0, %v1269
          %v1271 = vpop.f32.mrf.mxu0
          %v1272 = vadd.f32 0.0, %v1271
          %1273 = vmatmul.bf16.gmra.mxu0 %v1258
          %v1274 = vpop.f32.mrf.mxu0
          %v1275 = vadd.f32 0.0, %v1274
          %v1276 = vpop.f32.mrf.mxu0
          %v1277 = vadd.f32 0.0, %v1276
          %1278 = vdwg.mxu0
          %1279 = vrot.lane.b32.xlu0 %v1048, 112
          %v1280 = vpop.permute.xlu0 %1279
          %1281 = vrot.lane.b32.xlu0 %v1049, 112
          %v1282 = vpop.permute.xlu0 %1281
          %1283 = vrot.lane.b32.xlu0 %v1048, 80
          %v1284 = vpop.permute.xlu0 %1283
          %1285 = vrot.lane.b32.xlu0 %v1049, 80
          %v1286 = vpop.permute.xlu0 %1285
          %v1288 = vsel %vm1054, %v1280, 0
          %v1291 = vsel %vm1054, %v1282, 0
          %v1294 = vsel %vm1054, %v1284, 0
          %v1297 = vsel %vm1054, %v1286, 0
          %1299 = vmatpush.bf16.xpose.msra.mxu0 0
          %1300 = vmatpush.bf16.xpose.msra.mxu0 0
          %1301 = vmatpush.bf16.xpose.msra.mxu0 0
          %1302 = vmatpush.bf16.xpose.msra.mxu0 0
          %1303 = vmatpush.bf16.xpose.msra.mxu0 0
          %1304 = vmatpush.bf16.xpose.msra.mxu0 0
          %1305 = vmatpush.bf16.xpose.msra.mxu0 %v1297
          %1306 = vmatpush.bf16.xpose.msra.mxu0 %v1294
          %1307 = vmatmul.bf16.gmra.mxu0 %v1288
          %v1308 = vpop.f32.mrf.mxu0
          %v1309 = vadd.f32 %v1024, %v1308
          %v1310 = vpop.f32.mrf.mxu0
          %v1311 = vadd.f32 %v1024, %v1310
          %1312 = vmatmul.bf16.gmra.mxu0 %v1291
          %v1313 = vpop.f32.mrf.mxu0
          %v1314 = vadd.f32 %v1024, %v1313
          %v1315 = vpop.f32.mrf.mxu0
          %v1316 = vadd.f32 %v1024, %v1315
          %1317 = vdwg.mxu0
          %v1318 = vsel %vm737, %v1309, -inf
          %1319 = vmax.xlane.f32.xlu0 %v1318
          %v1320 = vpop.xlane.xlu0 %1319
          %v1321 = vsel %vm737, %v1311, -inf
          %1322 = vmax.xlane.f32.xlu0 %v1321
          %v1323 = vpop.xlane.xlu0 %1322
          %v1324 = vsel %vm737, %v1314, -inf
          %1325 = vmax.xlane.f32.xlu0 %v1324
          %v1326 = vpop.xlane.xlu0 %1325
          %v1327 = vsel %vm737, %v1316, -inf
          %1328 = vmax.xlane.f32.xlu0 %v1327
          %v1329 = vpop.xlane.xlu0 %1328
          %v1330 = vsub.f32 %v1309, %v1320
          %v1331 = vsub.f32 %v1311, %v1323
          %v1332 = vsub.f32 %v1314, %v1326
          %v1333 = vsub.f32 %v1316, %v1329
          %v1334 = vmul.f32 %v1330, 1.442695
          %v1335 = vpow.pop %v1334
          %v1336 = vmul.f32 %v1331, 1.442695
          %v1337 = vpow.pop %v1336
          %v1338 = vmul.f32 %v1332, 1.442695
          %v1339 = vpow.pop %v1338
          %v1340 = vmul.f32 %v1333, 1.442695
          %v1341 = vpow.pop %v1340
          %v1342 = vsel %vm737, %v1335, 0.0
          %1343 = vadd.xlane.f32.xlu0 %v1342
          %v1344 = vpop.xlane.xlu0 %1343
          %v1345 = vsel %vm737, %v1337, 0.0
          %1346 = vadd.xlane.f32.xlu0 %v1345
          %v1347 = vpop.xlane.xlu0 %1346
          %v1348 = vsel %vm737, %v1339, 0.0
          %1349 = vadd.xlane.f32.xlu0 %v1348
          %v1350 = vpop.xlane.xlu0 %1349
          %v1351 = vsel %vm737, %v1341, 0.0
          %1352 = vadd.xlane.f32.xlu0 %v1351
          %v1353 = vpop.xlane.xlu0 %1352
          %v1354 = vrcp.pop %v1344
          %v1355 = vrcp.pop %v1347
          %v1356 = vrcp.pop %v1350
          %v1357 = vrcp.pop %v1353
          %v1358 = vmul.f32 %v1335, %v1354
          %v1359 = vmul.f32 %v1337, %v1355
          %v1360 = vmul.f32 %v1339, %v1356
          %v1361 = vmul.f32 %v1341, %v1357
          %v1362 = vpack.c.bf16 %v1359, %v1358
          %v1363 = vpack.c.bf16 %v1361, %v1360
          %1364 = vrot.lane.b32.xlu0 %v1048, 48
          %v1365 = vpop.permute.xlu0 %1364
          %1366 = vrot.lane.b32.xlu0 %v1049, 48
          %v1367 = vpop.permute.xlu0 %1366
          %v1371 = vsel %vm737, %v1362, 0
          %v1374 = vsel %vm737, %v1363, 0
          %1376 = vmatpush.bf16.msra.mxu0 0
          %1377 = vmatpush.bf16.msra.mxu0 0
          %1378 = vmatpush.bf16.msra.mxu0 0
          %1379 = vmatpush.bf16.msra.mxu0 0
          %1380 = vmatpush.bf16.msra.mxu0 0
          %1381 = vmatpush.bf16.msra.mxu0 0
          %1382 = vmatpush.bf16.msra.mxu0 %v1367
          %1383 = vmatpush.bf16.msra.mxu0 %v1365
          %1384 = vmatmul.bf16.gmra.mxu0 %v1371
          %v1385 = vpop.f32.mrf.mxu0
          %v1386 = vadd.f32 0.0, %v1385
          %v1387 = vpop.f32.mrf.mxu0
          %v1388 = vadd.f32 0.0, %v1387
          %1389 = vmatmul.bf16.gmra.mxu0 %v1374
          %v1390 = vpop.f32.mrf.mxu0
          %v1391 = vadd.f32 0.0, %v1390
          %v1392 = vpop.f32.mrf.mxu0
          %v1393 = vadd.f32 0.0, %v1392
          %1394 = vdwg.mxu0
          %1395 = vrot.lane.b32.xlu0 %v1048, 104
          %v1396 = vpop.permute.xlu0 %1395
          %1397 = vrot.lane.b32.xlu0 %v1049, 104
          %v1398 = vpop.permute.xlu0 %1397
          %1399 = vrot.lane.b32.xlu0 %v1048, 72
          %v1400 = vpop.permute.xlu0 %1399
          %1401 = vrot.lane.b32.xlu0 %v1049, 72
          %v1402 = vpop.permute.xlu0 %1401
          %v1404 = vsel %vm1054, %v1396, 0
          %v1407 = vsel %vm1054, %v1398, 0
          %v1410 = vsel %vm1054, %v1400, 0
          %v1413 = vsel %vm1054, %v1402, 0
          %1415 = vmatpush.bf16.xpose.msra.mxu0 0
          %1416 = vmatpush.bf16.xpose.msra.mxu0 0
          %1417 = vmatpush.bf16.xpose.msra.mxu0 0
          %1418 = vmatpush.bf16.xpose.msra.mxu0 0
          %1419 = vmatpush.bf16.xpose.msra.mxu0 0
          %1420 = vmatpush.bf16.xpose.msra.mxu0 0
          %1421 = vmatpush.bf16.xpose.msra.mxu0 %v1413
          %1422 = vmatpush.bf16.xpose.msra.mxu0 %v1410
          %1423 = vmatmul.bf16.gmra.mxu0 %v1404
          %v1424 = vpop.f32.mrf.mxu0
          %v1425 = vadd.f32 %v1024, %v1424
          %v1426 = vpop.f32.mrf.mxu0
          %v1427 = vadd.f32 %v1024, %v1426
          %1428 = vmatmul.bf16.gmra.mxu0 %v1407
          %v1429 = vpop.f32.mrf.mxu0
          %v1430 = vadd.f32 %v1024, %v1429
          %v1431 = vpop.f32.mrf.mxu0
          %v1432 = vadd.f32 %v1024, %v1431
          %1433 = vdwg.mxu0
          %v1434 = vsel %vm737, %v1425, -inf
          %1435 = vmax.xlane.f32.xlu0 %v1434
          %v1436 = vpop.xlane.xlu0 %1435
          %v1437 = vsel %vm737, %v1427, -inf
          %1438 = vmax.xlane.f32.xlu0 %v1437
          %v1439 = vpop.xlane.xlu0 %1438
          %v1440 = vsel %vm737, %v1430, -inf
          %1441 = vmax.xlane.f32.xlu0 %v1440
          %v1442 = vpop.xlane.xlu0 %1441
          %v1443 = vsel %vm737, %v1432, -inf
          %1444 = vmax.xlane.f32.xlu0 %v1443
          %v1445 = vpop.xlane.xlu0 %1444
          %v1446 = vsub.f32 %v1425, %v1436
          %v1447 = vsub.f32 %v1427, %v1439
          %v1448 = vsub.f32 %v1430, %v1442
          %v1449 = vsub.f32 %v1432, %v1445
          %v1450 = vmul.f32 %v1446, 1.442695
          %v1451 = vpow.pop %v1450
          %v1452 = vmul.f32 %v1447, 1.442695
          %v1453 = vpow.pop %v1452
          %v1454 = vmul.f32 %v1448, 1.442695
          %v1455 = vpow.pop %v1454
          %v1456 = vmul.f32 %v1449, 1.442695
          %v1457 = vpow.pop %v1456
          %v1458 = vsel %vm737, %v1451, 0.0
          %1459 = vadd.xlane.f32.xlu0 %v1458
          %v1460 = vpop.xlane.xlu0 %1459
          %v1461 = vsel %vm737, %v1453, 0.0
          %1462 = vadd.xlane.f32.xlu0 %v1461
          %v1463 = vpop.xlane.xlu0 %1462
          %v1464 = vsel %vm737, %v1455, 0.0
          %1465 = vadd.xlane.f32.xlu0 %v1464
          %v1466 = vpop.xlane.xlu0 %1465
          %v1467 = vsel %vm737, %v1457, 0.0
          %1468 = vadd.xlane.f32.xlu0 %v1467
          %v1469 = vpop.xlane.xlu0 %1468
          %v1470 = vrcp.pop %v1460
          %v1471 = vrcp.pop %v1463
          %v1472 = vrcp.pop %v1466
          %v1473 = vrcp.pop %v1469
          %v1474 = vmul.f32 %v1451, %v1470
          %v1475 = vmul.f32 %v1453, %v1471
          %v1476 = vmul.f32 %v1455, %v1472
          %v1477 = vmul.f32 %v1457, %v1473
          %v1478 = vpack.c.bf16 %v1475, %v1474
          %v1479 = vpack.c.bf16 %v1477, %v1476
          %1480 = vrot.lane.b32.xlu0 %v1048, 40
          %v1481 = vpop.permute.xlu0 %1480
          %1482 = vrot.lane.b32.xlu0 %v1049, 40
          %v1483 = vpop.permute.xlu0 %1482
          %v1487 = vsel %vm737, %v1478, 0
          %v1490 = vsel %vm737, %v1479, 0
          %1492 = vmatpush.bf16.msra.mxu0 0
          %1493 = vmatpush.bf16.msra.mxu0 0
          %1494 = vmatpush.bf16.msra.mxu0 0
          %1495 = vmatpush.bf16.msra.mxu0 0
          %1496 = vmatpush.bf16.msra.mxu0 0
          %1497 = vmatpush.bf16.msra.mxu0 0
          %1498 = vmatpush.bf16.msra.mxu0 %v1483
          %1499 = vmatpush.bf16.msra.mxu0 %v1481
          %1500 = vmatmul.bf16.gmra.mxu0 %v1487
          %v1501 = vpop.f32.mrf.mxu0
          %v1502 = vadd.f32 0.0, %v1501
          %v1503 = vpop.f32.mrf.mxu0
          %v1504 = vadd.f32 0.0, %v1503
          %1505 = vmatmul.bf16.gmra.mxu0 %v1490
          %v1506 = vpop.f32.mrf.mxu0
          %v1507 = vadd.f32 0.0, %v1506
          %v1508 = vpop.f32.mrf.mxu0
          %v1509 = vadd.f32 0.0, %v1508
          %1510 = vdwg.mxu0
          %1515 = vrot.lane.b32.xlu0 %v1270, 8
          %v1516 = vpop.permute.xlu0 %1515
          %1517 = vrot.lane.b32.xlu0 %v1272, 8
          %v1518 = vpop.permute.xlu0 %1517
          %1519 = vrot.lane.b32.xlu0 %v1275, 8
          %v1520 = vpop.permute.xlu0 %1519
          %1521 = vrot.lane.b32.xlu0 %v1277, 8
          %v1522 = vpop.permute.xlu0 %1521
          %1531 = vrot.lane.b32.xlu0 %v1386, 16
          %v1532 = vpop.permute.xlu0 %1531
          %1533 = vrot.lane.b32.xlu0 %v1388, 16
          %v1534 = vpop.permute.xlu0 %1533
          %1535 = vrot.lane.b32.xlu0 %v1391, 16
          %v1536 = vpop.permute.xlu0 %1535
          %1537 = vrot.lane.b32.xlu0 %v1393, 16
          %v1538 = vpop.permute.xlu0 %1537
          %1547 = vrot.lane.b32.xlu0 %v1502, 24
          %v1548 = vpop.permute.xlu0 %1547
          %1549 = vrot.lane.b32.xlu0 %v1504, 24
          %v1550 = vpop.permute.xlu0 %1549
          %1551 = vrot.lane.b32.xlu0 %v1507, 24
          %v1552 = vpop.permute.xlu0 %1551
          %1553 = vrot.lane.b32.xlu0 %v1509, 24
          %v1554 = vpop.permute.xlu0 %1553
          %v1559 = vsel %vm1054, %v1154, %v1516
          %v1560 = vsel %vm1054, %v1156, %v1518
          %v1561 = vsel %vm1054, %v1159, %v1520
          %v1562 = vsel %vm1054, %v1161, %v1522
          %vm1563 = vcmask 130048
          %v1564 = vsel %vm1563, %v1559, %v1532
          %v1565 = vsel %vm1563, %v1560, %v1534
          %v1566 = vsel %vm1563, %v1561, %v1536
          %v1567 = vsel %vm1563, %v1562, %v1538
          %vm1568 = vcmask 195584
          %v1569 = vsel %vm1568, %v1564, %v1548
          %v1570 = vsel %vm1568, %v1565, %v1550
          %v1571 = vsel %vm1568, %v1566, %v1552
          %v1572 = vsel %vm1568, %v1567, %v1554
          %v1573 = vpack.c.bf16 %v1569, %v1569
          %v1574 = vpack.c.bf16 %v1570, %v1570
          %v1575 = vpack.c.bf16 %v1571, %v1571
          %v1576 = vpack.c.bf16 %v1572, %v1572
          %s1577 = smul.addr %s1032, 4
          %s1578 = scalar_lea.vmem [#allocation4], %s1577
          %vm1579 = vcmask 257024
          %1580 = vst.msk [vmem:[%s1578] sm:$0xf] %vm1579, %v1573
          %1581 = vst.msk [vmem:[%s1578 + $0x4] sm:$0xf] %vm1579, %v1574
          %1582 = vst.msk [vmem:[%s1578 + $0x8] sm:$0xf] %vm1579, %v1575
          %1583 = vst.msk [vmem:[%s1578 + $0xc] sm:$0xf] %vm1579, %v1576
        $region93: #{vit_super_forward.3} parent=83 // loop_footer
          %s1030 = sadd.s32 1, %s1026
        $region94: #{vit_super_forward.3} parent=83 // loop_footer_branch
          %1025 = sbr.rel target = $region90
        $region95: #{vit_super_forward.3} parent=83 // loop_exit
          _
        %v1584 = vld [vmem:[#allocation4] sm:$0xf]
        %v1585 = vld [vmem:[#allocation4 + $0x4] sm:$0xf]
        %v1586 = vld [vmem:[#allocation4 + $0x8] sm:$0xf]
        %v1587 = vld [vmem:[#allocation4 + $0xc] sm:$0xf]
        %v1588 = vld [vmem:[#allocation4 + $0x10] sm:$0xf]
        %v1589 = vld [vmem:[#allocation4 + $0x14] sm:$0xf]
        %v1590 = vld [vmem:[#allocation4 + $0x18] sm:$0xf]
        %v1591 = vld [vmem:[#allocation4 + $0x1c] sm:$0xf]
        %v1592 = vld [vmem:[%s679] sm:$0xf]
        %v1593 = vld [vmem:[%s679 + $0x4] sm:$0xf]
        %v1594 = vld [vmem:[%s679 + $0x8] sm:$0xf]
        %v1595 = vld [vmem:[%s679 + $0xc] sm:$0xf]
        %v1596 = vld [vmem:[%s682] sm:$0x1]
        %v1598 = vperm.slane %v1596, 0
        %v1608 = vunpack.c.l.b16 %v1584
        %v1609 = vunpack.c.l.b16 %v1585
        %v1610 = vunpack.c.l.b16 %v1586
        %v1611 = vunpack.c.l.b16 %v1587
        %v1612 = vunpack.c.l.b16 %v1588
        %v1613 = vunpack.c.l.b16 %v1589
        %v1614 = vunpack.c.l.b16 %v1590
        %v1615 = vunpack.c.l.b16 %v1591
        %v1616 = vpack.c.b16 %v1609, %v1608
        %v1617 = vpack.c.b16 %v1611, %v1610
        %v1618 = vpack.c.b16 %v1613, %v1612
        %v1619 = vpack.c.b16 %v1615, %v1614
        %v1624 = vunpack.c.l.b16 %v1592
        %v1625 = vunpack.c.l.b16 %v1593
        %v1626 = vunpack.c.l.b16 %v1594
        %v1627 = vunpack.c.l.b16 %v1595
        %v1628 = vpack.c.b16 %v1625, %v1624
        %v1629 = vpack.c.b16 %v1627, %v1626
        %v1633 = vsel %vm737, %v1616, 0
        %v1636 = vsel %vm737, %v1617, 0
        %v1639 = vsel %vm737, %v1618, 0
        %v1642 = vsel %vm737, %v1619, 0
        %1644 = vmatpush.bf16.msra.mxu0 0
        %1645 = vmatpush.bf16.msra.mxu0 0
        %1646 = vmatpush.bf16.msra.mxu0 0
        %1647 = vmatpush.bf16.msra.mxu0 0
        %1648 = vmatpush.bf16.msra.mxu0 0
        %1649 = vmatpush.bf16.msra.mxu0 0
        %1650 = vmatpush.bf16.msra.mxu0 %v1629
        %1651 = vmatpush.bf16.msra.mxu0 %v1628
        %1652 = vmatmul.bf16.gmra.mxu0 %v1633
        %v1653 = vpop.f32.mrf.mxu0
        %v1654 = vadd.f32 %v1598, %v1653
        %v1655 = vpop.f32.mrf.mxu0
        %v1656 = vadd.f32 %v1598, %v1655
        %1657 = vmatmul.bf16.gmra.mxu0 %v1636
        %v1658 = vpop.f32.mrf.mxu0
        %v1659 = vadd.f32 %v1598, %v1658
        %v1660 = vpop.f32.mrf.mxu0
        %v1661 = vadd.f32 %v1598, %v1660
        %1662 = vmatmul.bf16.gmra.mxu0 %v1639
        %v1663 = vpop.f32.mrf.mxu0
        %v1664 = vadd.f32 %v1598, %v1663
        %v1665 = vpop.f32.mrf.mxu0
        %v1666 = vadd.f32 %v1598, %v1665
        %1667 = vmatmul.bf16.gmra.mxu0 %v1642
        %v1668 = vpop.f32.mrf.mxu0
        %v1669 = vadd.f32 %v1598, %v1668
        %v1670 = vpop.f32.mrf.mxu0
        %v1671 = vadd.f32 %v1598, %v1670
        %1672 = vdwg.mxu0
        %v1673 = vadd.f32 %v727, %v1654
        %v1674 = vadd.f32 %v728, %v1656
        %v1675 = vadd.f32 %v729, %v1659
        %v1676 = vadd.f32 %v730, %v1661
        %v1677 = vadd.f32 %v731, %v1664
        %v1678 = vadd.f32 %v732, %v1666
        %v1679 = vadd.f32 %v733, %v1669
        %v1680 = vadd.f32 %v734, %v1671
        %v1681 = vld [vmem:[%s685] sm:$0x1]
        %v1682 = vld [vmem:[%s688] sm:$0x1]
        %v1683 = vsel %vm737, %v1673, 0.0
        %1684 = vadd.xlane.f32.xlu0 %v1683
        %v1685 = vpop.xlane.xlu0 %1684
        %v1686 = vsel %vm737, %v1674, 0.0
        %1687 = vadd.xlane.f32.xlu0 %v1686
        %v1688 = vpop.xlane.xlu0 %1687
        %v1689 = vsel %vm737, %v1675, 0.0
        %1690 = vadd.xlane.f32.xlu0 %v1689
        %v1691 = vpop.xlane.xlu0 %1690
        %v1692 = vsel %vm737, %v1676, 0.0
        %1693 = vadd.xlane.f32.xlu0 %v1692
        %v1694 = vpop.xlane.xlu0 %1693
        %v1695 = vsel %vm737, %v1677, 0.0
        %1696 = vadd.xlane.f32.xlu0 %v1695
        %v1697 = vpop.xlane.xlu0 %1696
        %v1698 = vsel %vm737, %v1678, 0.0
        %1699 = vadd.xlane.f32.xlu0 %v1698
        %v1700 = vpop.xlane.xlu0 %1699
        %v1701 = vsel %vm737, %v1679, 0.0
        %1702 = vadd.xlane.f32.xlu0 %v1701
        %v1703 = vpop.xlane.xlu0 %1702
        %v1704 = vsel %vm737, %v1680, 0.0
        %1705 = vadd.xlane.f32.xlu0 %v1704
        %v1706 = vpop.xlane.xlu0 %1705
        %v1707 = vmul.f32 %v1685, %v768
        %v1708 = vmul.f32 %v1688, %v768
        %v1709 = vmul.f32 %v1691, %v768
        %v1710 = vmul.f32 %v1694, %v768
        %v1711 = vmul.f32 %v1697, %v768
        %v1712 = vmul.f32 %v1700, %v768
        %v1713 = vmul.f32 %v1703, %v768
        %v1714 = vmul.f32 %v1706, %v768
        %v1715 = vsub.f32 %v1673, %v1707
        %v1716 = vsub.f32 %v1674, %v1708
        %v1717 = vsub.f32 %v1675, %v1709
        %v1718 = vsub.f32 %v1676, %v1710
        %v1719 = vsub.f32 %v1677, %v1711
        %v1720 = vsub.f32 %v1678, %v1712
        %v1721 = vsub.f32 %v1679, %v1713
        %v1722 = vsub.f32 %v1680, %v1714
        %v1723 = vmul.f32 %v1715, %v1715
        %v1724 = vmul.f32 %v1716, %v1716
        %v1725 = vmul.f32 %v1717, %v1717
        %v1726 = vmul.f32 %v1718, %v1718
        %v1727 = vmul.f32 %v1719, %v1719
        %v1728 = vmul.f32 %v1720, %v1720
        %v1729 = vmul.f32 %v1721, %v1721
        %v1730 = vmul.f32 %v1722, %v1722
        %v1731 = vsel %vm737, %v1723, 0.0
        %1732 = vadd.xlane.f32.xlu0 %v1731
        %v1733 = vpop.xlane.xlu0 %1732
        %v1734 = vsel %vm737, %v1724, 0.0
        %1735 = vadd.xlane.f32.xlu0 %v1734
        %v1736 = vpop.xlane.xlu0 %1735
        %v1737 = vsel %vm737, %v1725, 0.0
        %1738 = vadd.xlane.f32.xlu0 %v1737
        %v1739 = vpop.xlane.xlu0 %1738
        %v1740 = vsel %vm737, %v1726, 0.0
        %1741 = vadd.xlane.f32.xlu0 %v1740
        %v1742 = vpop.xlane.xlu0 %1741
        %v1743 = vsel %vm737, %v1727, 0.0
        %1744 = vadd.xlane.f32.xlu0 %v1743
        %v1745 = vpop.xlane.xlu0 %1744
        %v1746 = vsel %vm737, %v1728, 0.0
        %1747 = vadd.xlane.f32.xlu0 %v1746
        %v1748 = vpop.xlane.xlu0 %1747
        %v1749 = vsel %vm737, %v1729, 0.0
        %1750 = vadd.xlane.f32.xlu0 %v1749
        %v1751 = vpop.xlane.xlu0 %1750
        %v1752 = vsel %vm737, %v1730, 0.0
        %1753 = vadd.xlane.f32.xlu0 %v1752
        %v1754 = vpop.xlane.xlu0 %1753
        %v1755 = vmul.f32 %v1733, %v768
        %v1756 = vmul.f32 %v1736, %v768
        %v1757 = vmul.f32 %v1739, %v768
        %v1758 = vmul.f32 %v1742, %v768
        %v1759 = vmul.f32 %v1745, %v768
        %v1760 = vmul.f32 %v1748, %v768
        %v1761 = vmul.f32 %v1751, %v768
        %v1762 = vmul.f32 %v1754, %v768
        %v1763 = vadd.f32 %v1755, 1e-05
        %v1764 = vadd.f32 %v1756, 1e-05
        %v1765 = vadd.f32 %v1757, 1e-05
        %v1766 = vadd.f32 %v1758, 1e-05
        %v1767 = vadd.f32 %v1759, 1e-05
        %v1768 = vadd.f32 %v1760, 1e-05
        %v1769 = vadd.f32 %v1761, 1e-05
        %v1770 = vadd.f32 %v1762, 1e-05
        %v1771 = vrsqrt.pop %v1763
        %v1772 = vmul.f32 %v1771, %v1763
        %v1773 = vmul.f32 %v1772, %v1771
        %v1774 = vmul.f32 0.5, %v1773
        %v1775 = vsub.f32 1.5, %v1774
        %v1776 = vmul.f32 %v1771, %v1775
        %vm1777 = vweird.f32 %v1763
        %vm1778 = vweird.f32 %v1771
        %vm1779 = vmor %vm1777, %vm1778
        %v1780 = vsel %vm1779, %v1771, %v1776
        %v1781 = vrsqrt.pop %v1764
        %v1782 = vmul.f32 %v1781, %v1764
        %v1783 = vmul.f32 %v1782, %v1781
        %v1784 = vmul.f32 0.5, %v1783
        %v1785 = vsub.f32 1.5, %v1784
        %v1786 = vmul.f32 %v1781, %v1785
        %vm1787 = vweird.f32 %v1764
        %vm1788 = vweird.f32 %v1781
        %vm1789 = vmor %vm1787, %vm1788
        %v1790 = vsel %vm1789, %v1781, %v1786
        %v1791 = vrsqrt.pop %v1765
        %v1792 = vmul.f32 %v1791, %v1765
        %v1793 = vmul.f32 %v1792, %v1791
        %v1794 = vmul.f32 0.5, %v1793
        %v1795 = vsub.f32 1.5, %v1794
        %v1796 = vmul.f32 %v1791, %v1795
        %vm1797 = vweird.f32 %v1765
        %vm1798 = vweird.f32 %v1791
        %vm1799 = vmor %vm1797, %vm1798
        %v1800 = vsel %vm1799, %v1791, %v1796
        %v1801 = vrsqrt.pop %v1766
        %v1802 = vmul.f32 %v1801, %v1766
        %v1803 = vmul.f32 %v1802, %v1801
        %v1804 = vmul.f32 0.5, %v1803
        %v1805 = vsub.f32 1.5, %v1804
        %v1806 = vmul.f32 %v1801, %v1805
        %vm1807 = vweird.f32 %v1766
        %vm1808 = vweird.f32 %v1801
        %vm1809 = vmor %vm1807, %vm1808
        %v1810 = vsel %vm1809, %v1801, %v1806
        %v1811 = vrsqrt.pop %v1767
        %v1812 = vmul.f32 %v1811, %v1767
        %v1813 = vmul.f32 %v1812, %v1811
        %v1814 = vmul.f32 0.5, %v1813
        %v1815 = vsub.f32 1.5, %v1814
        %v1816 = vmul.f32 %v1811, %v1815
        %vm1817 = vweird.f32 %v1767
        %vm1818 = vweird.f32 %v1811
        %vm1819 = vmor %vm1817, %vm1818
        %v1820 = vsel %vm1819, %v1811, %v1816
        %v1821 = vrsqrt.pop %v1768
        %v1822 = vmul.f32 %v1821, %v1768
        %v1823 = vmul.f32 %v1822, %v1821
        %v1824 = vmul.f32 0.5, %v1823
        %v1825 = vsub.f32 1.5, %v1824
        %v1826 = vmul.f32 %v1821, %v1825
        %vm1827 = vweird.f32 %v1768
        %vm1828 = vweird.f32 %v1821
        %vm1829 = vmor %vm1827, %vm1828
        %v1830 = vsel %vm1829, %v1821, %v1826
        %v1831 = vrsqrt.pop %v1769
        %v1832 = vmul.f32 %v1831, %v1769
        %v1833 = vmul.f32 %v1832, %v1831
        %v1834 = vmul.f32 0.5, %v1833
        %v1835 = vsub.f32 1.5, %v1834
        %v1836 = vmul.f32 %v1831, %v1835
        %vm1837 = vweird.f32 %v1769
        %vm1838 = vweird.f32 %v1831
        %vm1839 = vmor %vm1837, %vm1838
        %v1840 = vsel %vm1839, %v1831, %v1836
        %v1841 = vrsqrt.pop %v1770
        %v1842 = vmul.f32 %v1841, %v1770
        %v1843 = vmul.f32 %v1842, %v1841
        %v1844 = vmul.f32 0.5, %v1843
        %v1845 = vsub.f32 1.5, %v1844
        %v1846 = vmul.f32 %v1841, %v1845
        %vm1847 = vweird.f32 %v1770
        %vm1848 = vweird.f32 %v1841
        %vm1849 = vmor %vm1847, %vm1848
        %v1850 = vsel %vm1849, %v1841, %v1846
        %v1851 = vmul.f32 %v1715, %v1780
        %v1852 = vmul.f32 %v1716, %v1790
        %v1853 = vmul.f32 %v1717, %v1800
        %v1854 = vmul.f32 %v1718, %v1810
        %v1855 = vmul.f32 %v1719, %v1820
        %v1856 = vmul.f32 %v1720, %v1830
        %v1857 = vmul.f32 %v1721, %v1840
        %v1858 = vmul.f32 %v1722, %v1850
        %v1860 = vperm.slane %v1681, 0
        %v1862 = vmul.f32 %v1851, %v1860
        %v1863 = vmul.f32 %v1852, %v1860
        %v1864 = vmul.f32 %v1853, %v1860
        %v1865 = vmul.f32 %v1854, %v1860
        %v1866 = vmul.f32 %v1855, %v1860
        %v1867 = vmul.f32 %v1856, %v1860
        %v1868 = vmul.f32 %v1857, %v1860
        %v1869 = vmul.f32 %v1858, %v1860
        %v1871 = vperm.slane %v1682, 0
        %v1873 = vadd.f32 %v1862, %v1871
        %v1874 = vadd.f32 %v1863, %v1871
        %v1875 = vadd.f32 %v1864, %v1871
        %v1876 = vadd.f32 %v1865, %v1871
        %v1877 = vadd.f32 %v1866, %v1871
        %v1878 = vadd.f32 %v1867, %v1871
        %v1879 = vadd.f32 %v1868, %v1871
        %v1880 = vadd.f32 %v1869, %v1871
        %v1881 = vpack.c.bf16 %v1874, %v1873
        %v1882 = vpack.c.bf16 %v1876, %v1875
        %v1883 = vpack.c.bf16 %v1878, %v1877
        %v1884 = vpack.c.bf16 %v1880, %v1879
        %v1885 = vld [vmem:[%s693] sm:$0xf]
        %v1886 = vld [vmem:[%s693 + $0x4] sm:$0xf]
        %v1887 = vld [vmem:[%s693 + $0x8] sm:$0xf]
        %v1888 = vld [vmem:[%s693 + $0xc] sm:$0xf]
        %v1889 = vld [vmem:[%s696] sm:$0x1]
        %v1891 = vperm.slane %v1889, 0
        %v1897 = vunpack.c.l.b16 %v1885
        %v1898 = vunpack.c.l.b16 %v1886
        %v1899 = vunpack.c.l.b16 %v1887
        %v1900 = vunpack.c.l.b16 %v1888
        %v1901 = vpack.c.b16 %v1898, %v1897
        %v1902 = vpack.c.b16 %v1900, %v1899
        %v1906 = vsel %vm737, %v1881, 0
        %v1909 = vsel %vm737, %v1882, 0
        %v1912 = vsel %vm737, %v1883, 0
        %v1915 = vsel %vm737, %v1884, 0
        %1917 = vmatpush.bf16.msra.mxu0 0
        %1918 = vmatpush.bf16.msra.mxu0 0
        %1919 = vmatpush.bf16.msra.mxu0 0
        %1920 = vmatpush.bf16.msra.mxu0 0
        %1921 = vmatpush.bf16.msra.mxu0 0
        %1922 = vmatpush.bf16.msra.mxu0 0
        %1923 = vmatpush.bf16.msra.mxu0 %v1902
        %1924 = vmatpush.bf16.msra.mxu0 %v1901
        %1925 = vmatmul.bf16.gmra.mxu0 %v1906
        %v1926 = vpop.f32.mrf.mxu0
        %v1927 = vadd.f32 %v1891, %v1926
        %v1928 = vpop.f32.mrf.mxu0
        %v1929 = vadd.f32 %v1891, %v1928
        %1930 = vmatmul.bf16.gmra.mxu0 %v1909
        %v1931 = vpop.f32.mrf.mxu0
        %v1932 = vadd.f32 %v1891, %v1931
        %v1933 = vpop.f32.mrf.mxu0
        %v1934 = vadd.f32 %v1891, %v1933
        %1935 = vmatmul.bf16.gmra.mxu0 %v1912
        %v1936 = vpop.f32.mrf.mxu0
        %v1937 = vadd.f32 %v1891, %v1936
        %v1938 = vpop.f32.mrf.mxu0
        %v1939 = vadd.f32 %v1891, %v1938
        %1940 = vmatmul.bf16.gmra.mxu0 %v1915
        %v1941 = vpop.f32.mrf.mxu0
        %v1942 = vadd.f32 %v1891, %v1941
        %v1943 = vpop.f32.mrf.mxu0
        %v1944 = vadd.f32 %v1891, %v1943
        %1945 = vdwg.mxu0
        %v1946 = vmul.f32 %v1927, 0.5
        %v1947 = vmul.f32 %v1929, 0.5
        %v1948 = vmul.f32 %v1932, 0.5
        %v1949 = vmul.f32 %v1934, 0.5
        %v1950 = vmul.f32 %v1937, 0.5
        %v1951 = vmul.f32 %v1939, 0.5
        %v1952 = vmul.f32 %v1942, 0.5
        %v1953 = vmul.f32 %v1944, 0.5
        %v1954 = vmul.f32 %v1927, 0.044715
        %v1955 = vmul.f32 %v1929, 0.044715
        %v1956 = vmul.f32 %v1932, 0.044715
        %v1957 = vmul.f32 %v1934, 0.044715
        %v1958 = vmul.f32 %v1937, 0.044715
        %v1959 = vmul.f32 %v1939, 0.044715
        %v1960 = vmul.f32 %v1942, 0.044715
        %v1961 = vmul.f32 %v1944, 0.044715
        %v1962 = vmul.f32 %v1954, %v1927
        %v1963 = vmul.f32 %v1955, %v1929
        %v1964 = vmul.f32 %v1956, %v1932
        %v1965 = vmul.f32 %v1957, %v1934
        %v1966 = vmul.f32 %v1958, %v1937
        %v1967 = vmul.f32 %v1959, %v1939
        %v1968 = vmul.f32 %v1960, %v1942
        %v1969 = vmul.f32 %v1961, %v1944
        %v1970 = vmul.f32 %v1962, %v1927
        %v1971 = vmul.f32 %v1963, %v1929
        %v1972 = vmul.f32 %v1964, %v1932
        %v1973 = vmul.f32 %v1965, %v1934
        %v1974 = vmul.f32 %v1966, %v1937
        %v1975 = vmul.f32 %v1967, %v1939
        %v1976 = vmul.f32 %v1968, %v1942
        %v1977 = vmul.f32 %v1969, %v1944
        %v1978 = vadd.f32 %v1927, %v1970
        %v1979 = vadd.f32 %v1929, %v1971
        %v1980 = vadd.f32 %v1932, %v1972
        %v1981 = vadd.f32 %v1934, %v1973
        %v1982 = vadd.f32 %v1937, %v1974
        %v1983 = vadd.f32 %v1939, %v1975
        %v1984 = vadd.f32 %v1942, %v1976
        %v1985 = vadd.f32 %v1944, %v1977
        %v1986 = vmul.f32 %v1978, 0.7978846
        %v1987 = vmul.f32 %v1979, 0.7978846
        %v1988 = vmul.f32 %v1980, 0.7978846
        %v1989 = vmul.f32 %v1981, 0.7978846
        %v1990 = vmul.f32 %v1982, 0.7978846
        %v1991 = vmul.f32 %v1983, 0.7978846
        %v1992 = vmul.f32 %v1984, 0.7978846
        %v1993 = vmul.f32 %v1985, 0.7978846
        %v1994 = vtanh.pop %v1986
        %v1995 = vtanh.pop %v1987
        %v1996 = vtanh.pop %v1988
        %v1997 = vtanh.pop %v1989
        %v1998 = vtanh.pop %v1990
        %v1999 = vtanh.pop %v1991
        %v2000 = vtanh.pop %v1992
        %v2001 = vtanh.pop %v1993
        %v2002 = vadd.f32 %v1994, 1.0
        %v2003 = vadd.f32 %v1995, 1.0
        %v2004 = vadd.f32 %v1996, 1.0
        %v2005 = vadd.f32 %v1997, 1.0
        %v2006 = vadd.f32 %v1998, 1.0
        %v2007 = vadd.f32 %v1999, 1.0
        %v2008 = vadd.f32 %v2000, 1.0
        %v2009 = vadd.f32 %v2001, 1.0
        %v2010 = vmul.f32 %v1946, %v2002
        %v2011 = vmul.f32 %v1947, %v2003
        %v2012 = vmul.f32 %v1948, %v2004
        %v2013 = vmul.f32 %v1949, %v2005
        %v2014 = vmul.f32 %v1950, %v2006
        %v2015 = vmul.f32 %v1951, %v2007
        %v2016 = vmul.f32 %v1952, %v2008
        %v2017 = vmul.f32 %v1953, %v2009
        %v2018 = vpack.c.bf16 %v2011, %v2010
        %v2019 = vpack.c.bf16 %v2013, %v2012
        %v2020 = vpack.c.bf16 %v2015, %v2014
        %v2021 = vpack.c.bf16 %v2017, %v2016
        %v2022 = vld [vmem:[%s701] sm:$0xf]
        %v2023 = vld [vmem:[%s701 + $0x4] sm:$0xf]
        %v2024 = vld [vmem:[%s701 + $0x8] sm:$0xf]
        %v2025 = vld [vmem:[%s701 + $0xc] sm:$0xf]
        %v2026 = vld [vmem:[%s701 + $0x10] sm:$0xf]
        %v2027 = vld [vmem:[%s701 + $0x14] sm:$0xf]
        %v2028 = vld [vmem:[%s701 + $0x18] sm:$0xf]
        %v2029 = vld [vmem:[%s701 + $0x1c] sm:$0xf]
        %v2030 = vld [vmem:[%s701 + $0x20] sm:$0xf]
        %v2031 = vld [vmem:[%s701 + $0x24] sm:$0xf]
        %v2032 = vld [vmem:[%s701 + $0x28] sm:$0xf]
        %v2033 = vld [vmem:[%s701 + $0x2c] sm:$0xf]
        %v2034 = vld [vmem:[%s701 + $0x30] sm:$0xf]
        %v2035 = vld [vmem:[%s701 + $0x34] sm:$0xf]
        %v2036 = vld [vmem:[%s701 + $0x38] sm:$0xf]
        %v2037 = vld [vmem:[%s701 + $0x3c] sm:$0xf]
        %v2038 = vld [vmem:[%s704] sm:$0x1]
        %v2040 = vperm.slane %v2038, 0
        %v2058 = vunpack.c.l.b16 %v2022
        %v2059 = vunpack.c.l.b16 %v2023
        %v2060 = vunpack.c.l.b16 %v2024
        %v2061 = vunpack.c.l.b16 %v2025
        %v2062 = vunpack.c.l.b16 %v2026
        %v2063 = vunpack.c.l.b16 %v2027
        %v2064 = vunpack.c.l.b16 %v2028
        %v2065 = vunpack.c.l.b16 %v2029
        %v2066 = vunpack.c.l.b16 %v2030
        %v2067 = vunpack.c.l.b16 %v2031
        %v2068 = vunpack.c.l.b16 %v2032
        %v2069 = vunpack.c.l.b16 %v2033
        %v2070 = vunpack.c.l.b16 %v2034
        %v2071 = vunpack.c.l.b16 %v2035
        %v2072 = vunpack.c.l.b16 %v2036
        %v2073 = vunpack.c.l.b16 %v2037
        %v2074 = vpack.c.b16 %v2059, %v2058
        %v2075 = vpack.c.b16 %v2061, %v2060
        %v2076 = vpack.c.b16 %v2063, %v2062
        %v2077 = vpack.c.b16 %v2065, %v2064
        %v2078 = vpack.c.b16 %v2067, %v2066
        %v2079 = vpack.c.b16 %v2069, %v2068
        %v2080 = vpack.c.b16 %v2071, %v2070
        %v2081 = vpack.c.b16 %v2073, %v2072
        %2090 = vmatpush.bf16.msra.mxu0 %v2081
        %2091 = vmatpush.bf16.msra.mxu0 %v2080
        %2092 = vmatpush.bf16.msra.mxu0 %v2079
        %2093 = vmatpush.bf16.msra.mxu0 %v2078
        %2094 = vmatpush.bf16.msra.mxu0 %v2077
        %2095 = vmatpush.bf16.msra.mxu0 %v2076
        %2096 = vmatpush.bf16.msra.mxu0 %v2075
        %2097 = vmatpush.bf16.msra.mxu0 %v2074
        %2098 = vmatmul.bf16.gmra.mxu0 %v2018
        %v2099 = vpop.f32.mrf.mxu0
        %v2100 = vadd.f32 %v2040, %v2099
        %v2101 = vpop.f32.mrf.mxu0
        %v2102 = vadd.f32 %v2040, %v2101
        %2103 = vmatmul.bf16.gmra.mxu0 %v2019
        %v2104 = vpop.f32.mrf.mxu0
        %v2105 = vadd.f32 %v2040, %v2104
        %v2106 = vpop.f32.mrf.mxu0
        %v2107 = vadd.f32 %v2040, %v2106
        %2108 = vmatmul.bf16.gmra.mxu0 %v2020
        %v2109 = vpop.f32.mrf.mxu0
        %v2110 = vadd.f32 %v2040, %v2109
        %v2111 = vpop.f32.mrf.mxu0
        %v2112 = vadd.f32 %v2040, %v2111
        %2113 = vmatmul.bf16.gmra.mxu0 %v2021
        %v2114 = vpop.f32.mrf.mxu0
        %v2115 = vadd.f32 %v2040, %v2114
        %v2116 = vpop.f32.mrf.mxu0
        %v2117 = vadd.f32 %v2040, %v2116
        %2118 = vdwg.mxu0
        %v2119 = vadd.f32 %v1673, %v2100
        %v2120 = vadd.f32 %v1674, %v2102
        %v2121 = vadd.f32 %v1675, %v2105
        %v2122 = vadd.f32 %v1676, %v2107
        %v2123 = vadd.f32 %v1677, %v2110
        %v2124 = vadd.f32 %v1678, %v2112
        %v2125 = vadd.f32 %v1679, %v2115
        %v2126 = vadd.f32 %v1680, %v2117
        %2127 = vst.msk [vmem:[#allocation2] sm:$0xff] %vm737, %v2119
        %2128 = vst.msk [vmem:[#allocation2 + $0x8] sm:$0xff] %vm737, %v2120
        %2129 = vst.msk [vmem:[#allocation2 + $0x10] sm:$0xff] %vm737, %v2121
        %2130 = vst.msk [vmem:[#allocation2 + $0x18] sm:$0xff] %vm737, %v2122
        %2131 = vst.msk [vmem:[#allocation2 + $0x20] sm:$0xff] %vm737, %v2123
        %2132 = vst.msk [vmem:[#allocation2 + $0x28] sm:$0xff] %vm737, %v2124
        %2133 = vst.msk [vmem:[#allocation2 + $0x30] sm:$0xff] %vm737, %v2125
        %2134 = vst.msk [vmem:[#allocation2 + $0x38] sm:$0xff] %vm737, %v2126
        %p2135 = scmp.eq.s32.totalorder %s33, 1
        // Predicated region
        $region96: #{vit_super_forward.3} parent=83 // pred_check
          %p2136 = pneg %p2135
        $region97: #{vit_super_forward.3} parent=83 // pred_check_branch
          %2138 = sbr.rel (%p2136) target = $region99
        $region98: #{vit_super_forward.3} parent=83 // pred_region
          %v2140 = vrot.slane %v2123, 7
          %vm2142 = vcmask 1040384
          %v2143 = vsel %vm2142, %v2119, %v2140
          %v2144 = vld [vmem:[%s12] sm:$0x1]
          %v2145 = vld [vmem:[%s13] sm:$0x1]
          %vm2146 = vcmask 254976
          %v2147 = vsel %vm2146, %v2143, 0.0
          %2148 = vadd.xlane.f32.xlu0 %v2147
          %v2149 = vpop.xlane.xlu0 %2148
          %v2150 = vmul.f32 %v2149, %v768
          %v2151 = vsub.f32 %v2143, %v2150
          %v2152 = vmul.f32 %v2151, %v2151
          %v2153 = vsel %vm2146, %v2152, 0.0
          %2154 = vadd.xlane.f32.xlu0 %v2153
          %v2155 = vpop.xlane.xlu0 %2154
          %v2156 = vmul.f32 %v2155, %v768
          %v2157 = vadd.f32 %v2156, 1e-05
          %v2158 = vrsqrt.pop %v2157
          %v2159 = vmul.f32 %v2158, %v2157
          %v2160 = vmul.f32 %v2159, %v2158
          %v2161 = vmul.f32 0.5, %v2160
          %v2162 = vsub.f32 1.5, %v2161
          %v2163 = vmul.f32 %v2158, %v2162
          %vm2164 = vweird.f32 %v2157
          %vm2165 = vweird.f32 %v2158
          %vm2166 = vmor %vm2164, %vm2165
          %v2167 = vsel %vm2166, %v2158, %v2163
          %v2168 = vmul.f32 %v2151, %v2167
          %v2170 = vperm.slane %v2144, 0
          %v2172 = vmul.f32 %v2168, %v2170
          %v2174 = vperm.slane %v2145, 0
          %v2176 = vadd.f32 %v2172, %v2174
          %v2177 = vpack.c.bf16 %v2176, %v2176
          %v2178 = vld [vmem:[%s14] sm:$0xf]
          %v2179 = vld [vmem:[%s14 + $0x4] sm:$0xf]
          %v2180 = vld [vmem:[%s14 + $0x8] sm:$0xf]
          %v2181 = vld [vmem:[%s14 + $0xc] sm:$0xf]
          %v2182 = vld [vmem:[%s15] sm:$0x1]
          %v2184 = vperm.slane %v2182, 0
          %v2190 = vunpack.c.l.b16 %v2178
          %v2191 = vunpack.c.l.b16 %v2179
          %v2192 = vunpack.c.l.b16 %v2180
          %v2193 = vunpack.c.l.b16 %v2181
          %v2194 = vpack.c.b16 %v2191, %v2190
          %v2195 = vpack.c.b16 %v2193, %v2192
          %v2199 = vsel %vm737, %v2177, 0
          %2201 = vmatpush.bf16.msra.mxu0 0
          %2202 = vmatpush.bf16.msra.mxu0 0
          %2203 = vmatpush.bf16.msra.mxu0 0
          %2204 = vmatpush.bf16.msra.mxu0 0
          %2205 = vmatpush.bf16.msra.mxu0 0
          %2206 = vmatpush.bf16.msra.mxu0 0
          %2207 = vmatpush.bf16.msra.mxu0 %v2195
          %2208 = vmatpush.bf16.msra.mxu0 %v2194
          %2209 = vmatmul.bf16.gmra.mxu0 %v2199
          %v2210 = vpop.f32.mrf.mxu0
          %v2211 = vadd.f32 %v2184, %v2210
          %v2212 = vpop.f32.mrf.mxu0
          %2213 = vdwg.mxu0
          %2214 = vst [vmem:[#allocation5] sm:$0x3] %v2211
        $region99: #{vit_super_forward.3} parent=83 // pred_fallthru
          _
        // Predicated region
        $region100: #{vit_super_forward.3} parent=83 // pred_check
          %p2215 = pneg %p454
        $region101: #{vit_super_forward.3} parent=83 // pred_check_branch
          %2217 = sbr.rel (%p2215) target = $region103
        $region102: #{vit_super_forward.3} parent=83 // pred_region
          %2219 = vsyncadd [#allocation6], 0
          %s2220 = smul.addr %s32, 2
          %s2221 = scalar_lea.hbm %s16, %s2220
          %s2223 = sshll.u32 [#allocation5], 4
          %s2224 = int_to_ptr.vmem [resolvable:$true] %s2223
          %s2225 = sshll.u32 %s2221, 4
          %s2226 = int_to_ptr.hbm [resolvable:$true] %s2225
          %2228 = dma.vmem_to_hbm [thread:$0]  %s2224, 32, %s2226, [#allocation6]
        $region103: #{vit_super_forward.3} parent=83 // pred_fallthru
          _
        // Predicated region
        $region104: #{vit_super_forward.3} parent=83 // pred_check
          %p2229 = pneg %p454
        $region105: #{vit_super_forward.3} parent=83 // pred_check_branch
          %2231 = sbr.rel (%p2229) target = $region107
        $region106: #{vit_super_forward.3} parent=83 // pred_region
          %2233 = dma.done [#allocation6], 32
        $region107: #{vit_super_forward.3} parent=83 // pred_fallthru
          _
      $region84: #{vit_super_forward.3} parent=5 // pred_fallthru
        _
      %p2234 = scmp.le.s32.totalorder 2, %s23
      // Predicated region
      $region108: #{vit_super_forward.3} parent=5 // pred_check
        %p2235 = pneg %p2234
      $region109: #{vit_super_forward.3} parent=5 // pred_check_branch
        %2237 = sbr.rel (%p2235) target = $region111
      $region110: #{vit_super_forward.3} parent=5 // pred_region
        %s2238 = ssub.s32 %s23, 2
      $region111: #{vit_super_forward.3} parent=5 // pred_fallthru
        _
    $region6: #{vit_super_forward.3} parent=1 // loop_footer
      %s27 = sadd.s32 1, %s23
    $region7: #{vit_super_forward.3} parent=1 // loop_footer_branch
      %22 = sbr.rel target = $region3
    $region8: #{vit_super_forward.3} parent=1 // loop_exit
      _
    %2239 = vsyncpa [#allocation6], 1
    %s2240 = scalar_lea.sflag [#allocation6], 1
    %2241 = vsyncpa %s2240, 1

</llo_original>
